<compile_context>
chip_gen: v5e
topology: v5e:2x2
jax: 0.10.0
libtpu: 0.0.40
codegen_flags: <defaults>
</compile_context>

<pallas_src>
import jax
import jax.numpy as jnp
from jax.experimental import pallas as pl
from jax.experimental.pallas import tpu as pltpu


def _round_up(x: int, m: int) -> int:
    return ((x + m - 1) // m) * m


def _make_kernel(n_hidden: int, hp: int, n_sub: int, sub_rows: int, matmul_dtype):
    """Kernel closing over static hidden-layer count, padded width and sub-tiling."""
    n_rest = n_hidden - 1  # hidden layers after the fused first one

    def kernel(*refs):
        # refs = [x, Wcat, bcat, (W_i, b_i) * n_rest, W_last, out]
        x_ref, wcat_ref, bcat_ref = refs[0], refs[1], refs[2]
        idx = 3
        rest = []
        for _ in range(n_rest):
            rest.append((refs[idx], refs[idx + 1]))
            idx += 2
        w_last_ref = refs[idx]
        out_ref = refs[idx + 1]

        wcat = wcat_ref[...]                       # bf16 (or f32) weights
        bcat = bcat_ref[...].astype(jnp.float32)   # biases stay f32

        # Each sub-tile is an independent dependency chain; emitting both in the
        # same basic block lets the LLO scheduler overlap MXU (matmul) of one
        # sub-tile with EUP (tanh) of the other.
        subs = []
        for s in range(n_sub):
            xs = x_ref[pl.ds(s * sub_rows, sub_rows), :].astype(matmul_dtype)
            # One MXU push for everything that consumes x: [Wu | Wv | W0].
            t = jnp.dot(xs, wcat, preferred_element_type=jnp.float32) + bcat
            # hp is a multiple of 128 -> lane-aligned static slices.
            u = jnp.tanh(t[:, :hp])
            v = jnp.tanh(t[:, hp:2 * hp])
            d = 0.5 * (v - u)   # fused gate: (1 - s/2)*u + (s/2)*v == u + s*d
            h = u + jnp.tanh(t[:, 2 * hp:]) * d
            subs.append((u, d, h))

        # Remaining hidden layers.
        for w_ref, b_ref in rest:
            w = w_ref[...]
            b = b_ref[...].astype(jnp.float32)
            new_subs = []
            for (u, d, h) in subs:
                z = jnp.dot(h.astype(matmul_dtype), w,
                            preferred_element_type=jnp.float32) + b
                new_subs.append((u, d, u + jnp.tanh(z) * d))
            subs = new_subs

        # Last layer: Linear without bias.  Output block width == true d_out
        # (no lane padding -> no inflated HBM writeback).
        w_last = w_last_ref[...]
        for s, (_, _, h) in enumerate(subs):
            out_ref[pl.ds(s * sub_rows, sub_rows), :] = jnp.dot(
                h.astype(matmul_dtype), w_last,
                preferred_element_type=jnp.float32,
            ).astype(out_ref.dtype)

    return kernel


def modified_mlp_pallas(x, params, *, block_batch=1024, matmul_dtype=jnp.bfloat16,
                        vmem_limit_bytes=None, interleave=True):
    """Run ModifiedMLP forward with a single Pallas kernel, tiled over batch.

    params: dict with keys
        'wu','bu','wv','bv'             encoders  (Wu: (D_in,H), bu: (1,H))
        'hidden': list of (W_i, b_i)    hidden layers (W_i: (in,H), b_i: (1,H))
        'w_last'                        last layer (H, D_out), no bias
    """
    n, d_in = x.shape
    hidden = params["hidden"]
    n_hidden = len(hidden)
    assert n_hidden >= 1, "ModifiedMLP needs at least one hidden layer"

    h_dim = params["wu"].shape[1]
    d_out = params["w_last"].shape[1]

    # The kernel assumes a uniform hidden width (all gates share u/v of width H).
    assert params["wv"].shape[1] == h_dim
    assert params["w_last"].shape[0] == h_dim
    assert hidden[0][0].shape == (d_in, h_dim)
    for w, b in hidden:
        assert w.shape[1] == h_dim and b.shape[1] == h_dim
    for w, _ in hidden[1:]:
        assert w.shape[0] == h_dim

    hp = _round_up(h_dim, 128)   # padded hidden width (full vreg lanes)

    def pad2(a, rows, cols, dtype):
        a = a.astype(dtype)
        return jnp.pad(a, ((0, rows - a.shape[0]), (0, cols - a.shape[1])))

    f32 = jnp.float32
    wdt = matmul_dtype

    # Fuse the three x-consuming matmuls: [Wu | Wv | W0] and their biases.
    w0, b0 = hidden[0]
    wcat = jnp.concatenate(
        [pad2(params["wu"], d_in, hp, wdt),
         pad2(params["wv"], d_in, hp, wdt),
         pad2(w0, d_in, hp, wdt)], axis=1)              # (d_in, 3*hp) in bf16
    bcat = jnp.concatenate(
        [pad2(params["bu"], 1, hp, f32),
         pad2(params["bv"], 1, hp, f32),
         pad2(b0, 1, hp, f32)], axis=1)                 # (1, 3*hp) in f32

    operands = [None, wcat, bcat]
    for w, b in hidden[1:]:
        operands += [pad2(w, hp, hp, wdt), pad2(b, 1, hp, f32)]
    operands.append(pad2(params["w_last"], hp, d_out, wdt))

    # Batch tile: cap so the grid has >=2 steps when possible (v7x has 2 TCs and
    # shards the 'parallel' axis across them); keep it a multiple of 8 and pad n.
    half = _round_up(max(8, (n + 1) // 2), 8)
    bb = max(8, (min(block_batch, half) // 8) * 8)
    n_pad = _round_up(n, bb)
    xp = x if n_pad == n else jnp.pad(x, ((0, n_pad - n), (0, 0)))
    operands[0] = xp

    # Two independent sub-tiles per grid step (MXU/EUP overlap) when alignment allows.
    n_sub = 2 if (interleave and bb >= 16 and bb % 16 == 0) else 1
    sub_rows = bb // n_sub

    kernel = _make_kernel(n_hidden, hp, n_sub, sub_rows, matmul_dtype)

    # Explicit VMEM budget: resident weights/biases (x buffers) + pipelined x/out
    # tiles + in-kernel f32 intermediates, with headroom; clamp to v7x's 64 MiB.
    if vmem_limit_bytes is None:
        weight_bytes = sum(int(op.size) * op.dtype.itemsize for op in operands[1:])
        x_tile_bytes = bb * d_in * xp.dtype.itemsize
        out_tile_bytes = bb * d_out * 4
        act_bytes = 40 * bb * hp  # t,u,v,d,h (+ casts), generous
        est = 2 * weight_bytes + 2 * x_tile_bytes + 2 * out_tile_bytes + act_bytes + (4 << 20)
        vmem_limit_bytes = int(min(64 << 20, max(32 << 20, est)))

    # Advisory cost estimate (totals over the whole call).
    matmul_flops = 2 * n_pad * (d_in * 3 * hp + (n_hidden - 1) * hp * hp + hp * d_out)
    gate_flops = 4 * n_pad * hp * n_hidden + 2 * n_pad * hp
    transcendentals = n_pad * hp * (n_hidden + 2)
    bytes_accessed = (
        int(xp.size) * xp.dtype.itemsize + n_pad * d_out * 4
        + sum(int(op.size) * op.dtype.itemsize for op in operands[1:])
    )
    cost = pl.CostEstimate(
        flops=int(matmul_flops + gate_flops),
        transcendentals=int(transcendentals),
        bytes_accessed=int(bytes_accessed),
    )

    def call_pallas(single_buffer_weights: bool):
        in_specs = [pl.BlockSpec((bb, d_in), lambda i: (i, 0))]
        for op in operands[1:]:
            if single_buffer_weights:
                # Grid-invariant block: constant index_map, no re-DMA, so a single
                # VMEM buffer suffices (halves resident weight VMEM).
                in_specs.append(pl.BlockSpec(op.shape, lambda i: (0, 0),
                                             pipeline_mode=pl.Buffered(1)))
            else:
                in_specs.append(pl.BlockSpec(op.shape, lambda i: (0, 0)))
        out = pl.pallas_call(
            kernel,
            out_shape=jax.ShapeDtypeStruct((n_pad, d_out), x.dtype),
            grid_spec=pltpu.PrefetchScalarGridSpec(
                num_scalar_prefetch=0,
                grid=(n_pad // bb,),
                in_specs=in_specs,
                out_specs=pl.BlockSpec((bb, d_out), lambda i: (i, 0)),
            ),
            compiler_params=pltpu.CompilerParams(
                dimension_semantics=("parallel",),
                vmem_limit_bytes=vmem_limit_bytes,
            ),
            cost_estimate=cost,
        )(*operands)
        return jax.block_until_ready(out)

    try:
        out = call_pallas(True)
    except Exception:
        # This JAX build rejected single-buffered pipeline_mode; fall back to the
        # default double-buffered grid-invariant weights.
        out = call_pallas(False)

    return out[:n]


def modified_mlp_ref(x, params):
    """Pure-JAX reference matching the PyTorch forward exactly."""
    u = jnp.tanh(x @ params["wu"] + params["bu"])
    v = jnp.tanh(x @ params["wv"] + params["bv"])
    h = x
    for w, b in params["hidden"]:
        h = jnp.tanh(h @ w + b)
        h = h / 2.0
        h = (1.0 - h) * u + h * v
    return h @ params["w_last"]


def init_params(key, nn_layers):
    """Deterministic xavier_normal-style init (weights), zero biases."""

    def xavier(key, fan_in, fan_out):
        std = jnp.sqrt(2.0 / (fan_in + fan_out))
        return std * jax.random.normal(key, (fan_in, fan_out), dtype=jnp.float32)

    d_in, h = nn_layers[0], nn_layers[1]
    keys = jax.random.split(key, 3 + len(nn_layers))
    params = {
        "wu": xavier(keys[0], d_in, h),
        "bu": jnp.zeros((1, h), jnp.float32),
        "wv": xavier(keys[1], d_in, h),
        "bv": jnp.zeros((1, h), jnp.float32),
        "hidden": [],
        "w_last": xavier(keys[2], nn_layers[-2], nn_layers[-1]),
    }
    for i in range(len(nn_layers) - 2):
        w = xavier(keys[3 + i], nn_layers[i], nn_layers[i + 1])
        b = jnp.zeros((1, nn_layers[i + 1]), jnp.float32)
        params["hidden"].append((w, b))
    return params


if __name__ == "__main__":
    # NN_LAYERS analogous to the docstring example, sized for a small test.
    NN_LAYERS = [2, 32, 32, 1]
    BATCH = 256

    key = jax.random.PRNGKey(0)
    kx, kp = jax.random.split(key)
    x = jax.random.normal(kx, (BATCH, NN_LAYERS[0]), dtype=jnp.float32)
    params = init_params(kp, NN_LAYERS)

    ref = modified_mlp_ref(x, params)

    # Default (optimized) path: bf16 matmuls, f32 gate/tanh -> relaxed tolerance.
    out = modified_mlp_pallas(x, params)
    out = jax.block_until_ready(out)
    assert out.shape == (BATCH, NN_LAYERS[-1])
    assert jnp.allclose(out, ref, atol=3e-2, rtol=3e-2), (
        f"bf16 path: max abs err = {jnp.max(jnp.abs(out - ref))}"
    )

    # Full-precision path: validates the kernel structure exactly.
    out_f32 = modified_mlp_pallas(x, params, matmul_dtype=jnp.float32)
    out_f32 = jax.block_until_ready(out_f32)
    assert jnp.allclose(out_f32, ref, atol=2e-5, rtol=2e-5), (
        f"f32 path: max abs err = {jnp.max(jnp.abs(out_f32 - ref))}"
    )

    print("KERNEL_OK")
</pallas_src>

<mosaic_0001>
module attributes {stable_mosaic.version = 11 : i64} {
  func.func @kernel(%arg0: i32, %arg1: memref<128x2xf32, #tpu.memory_space<vmem>>, %arg2: memref<2x384xbf16, #tpu.memory_space<vmem>>, %arg3: memref<1x384xf32, #tpu.memory_space<vmem>>, %arg4: memref<128x128xbf16, #tpu.memory_space<vmem>>, %arg5: memref<1x128xf32, #tpu.memory_space<vmem>>, %arg6: memref<128x1xbf16, #tpu.memory_space<vmem>>, %arg7: memref<128x1xf32, #tpu.memory_space<vmem>>) attributes {dimension_semantics = [#tpu.dimension_semantics<parallel>], iteration_bounds = array<i64: 2>, scalar_prefetch = 0 : i64, scratch_operands = 0 : i64, tpu.core_type = #tpu.core_type<tc>, window_params = [{transform_indices = @transform_0, window_bounds = array<i64: 128, 2>}, {pipeline_mode = #tpu.pipeline_mode<synchronous>, transform_indices = @transform_1, window_bounds = array<i64: 2, 384>}, {pipeline_mode = #tpu.pipeline_mode<synchronous>, transform_indices = @transform_2, window_bounds = array<i64: 1, 384>}, {pipeline_mode = #tpu.pipeline_mode<synchronous>, transform_indices = @transform_3, window_bounds = array<i64: 128, 128>}, {pipeline_mode = #tpu.pipeline_mode<synchronous>, transform_indices = @transform_4, window_bounds = array<i64: 1, 128>}, {pipeline_mode = #tpu.pipeline_mode<synchronous>, transform_indices = @transform_5, window_bounds = array<i64: 128, 1>}, {transform_indices = @transform_6, window_bounds = array<i64: 128, 1>}]} {
    %c0 = arith.constant 0 : index
    %c0_0 = arith.constant 0 : index
    %0 = vector.load %arg2[%c0, %c0_0] : memref<2x384xbf16, #tpu.memory_space<vmem>>, vector<2x384xbf16>
    %c0_1 = arith.constant 0 : index
    %c0_2 = arith.constant 0 : index
    %1 = vector.load %arg3[%c0_1, %c0_2] : memref<1x384xf32, #tpu.memory_space<vmem>>, vector<1x384xf32>
    %c0_3 = arith.constant 0 : index
    %c0_4 = arith.constant 0 : index
    %2 = vector.load %arg1[%c0_3, %c0_4] : memref<128x2xf32, #tpu.memory_space<vmem>>, vector<64x2xf32>
    %3 = arith.truncf %2 : vector<64x2xf32> to vector<64x2xbf16>
    %cst = arith.constant dense<0.000000e+00> : vector<64x384xf32>
    %4 = tpu.matmul %3, %0, %cst {dimension_numbers = #tpu.dot_dimension_numbers<[1], [0], [0], [1], [0, 0, 1, 1], [], []>} : vector<64x2xbf16>, vector<2x384xbf16>, vector<64x384xf32> -> vector<64x384xf32>
    %5 = vector.broadcast %1 : vector<1x384xf32> to vector<64x384xf32>
    %6 = arith.addf %4, %5 : vector<64x384xf32>
    %7 = vector.extract_strided_slice %6 {offsets = [0, 0], sizes = [64, 128], strides = [1, 1]} : vector<64x384xf32> to vector<64x128xf32>
    %8 = math.tanh %7 : vector<64x128xf32>
    %9 = vector.extract_strided_slice %6 {offsets = [0, 128], sizes = [64, 128], strides = [1, 1]} : vector<64x384xf32> to vector<64x128xf32>
    %10 = math.tanh %9 : vector<64x128xf32>
    %11 = arith.subf %10, %8 : vector<64x128xf32>
    %cst_5 = arith.constant 5.000000e-01 : f32
    %12 = vector.broadcast %cst_5 : f32 to vector<64x128xf32>
    %13 = arith.mulf %12, %11 : vector<64x128xf32>
    %14 = vector.extract_strided_slice %6 {offsets = [0, 256], sizes = [64, 128], strides = [1, 1]} : vector<64x384xf32> to vector<64x128xf32>
    %15 = math.tanh %14 : vector<64x128xf32>
    %16 = arith.mulf %15, %13 : vector<64x128xf32>
    %17 = arith.addf %8, %16 : vector<64x128xf32>
    %c64 = arith.constant 64 : index
    %c0_6 = arith.constant 0 : index
    %18 = vector.load %arg1[%c64, %c0_6] : memref<128x2xf32, #tpu.memory_space<vmem>>, vector<64x2xf32>
    %19 = arith.truncf %18 : vector<64x2xf32> to vector<64x2xbf16>
    %cst_7 = arith.constant dense<0.000000e+00> : vector<64x384xf32>
    %20 = tpu.matmul %19, %0, %cst_7 {dimension_numbers = #tpu.dot_dimension_numbers<[1], [0], [0], [1], [0, 0, 1, 1], [], []>} : vector<64x2xbf16>, vector<2x384xbf16>, vector<64x384xf32> -> vector<64x384xf32>
    %21 = vector.broadcast %1 : vector<1x384xf32> to vector<64x384xf32>
    %22 = arith.addf %20, %21 : vector<64x384xf32>
    %23 = vector.extract_strided_slice %22 {offsets = [0, 0], sizes = [64, 128], strides = [1, 1]} : vector<64x384xf32> to vector<64x128xf32>
    %24 = math.tanh %23 : vector<64x128xf32>
    %25 = vector.extract_strided_slice %22 {offsets = [0, 128], sizes = [64, 128], strides = [1, 1]} : vector<64x384xf32> to vector<64x128xf32>
    %26 = math.tanh %25 : vector<64x128xf32>
    %27 = arith.subf %26, %24 : vector<64x128xf32>
    %cst_8 = arith.constant 5.000000e-01 : f32
    %28 = vector.broadcast %cst_8 : f32 to vector<64x128xf32>
    %29 = arith.mulf %28, %27 : vector<64x128xf32>
    %30 = vector.extract_strided_slice %22 {offsets = [0, 256], sizes = [64, 128], strides = [1, 1]} : vector<64x384xf32> to vector<64x128xf32>
    %31 = math.tanh %30 : vector<64x128xf32>
    %32 = arith.mulf %31, %29 : vector<64x128xf32>
    %33 = arith.addf %24, %32 : vector<64x128xf32>
    %c0_9 = arith.constant 0 : index
    %c0_10 = arith.constant 0 : index
    %34 = vector.load %arg4[%c0_9, %c0_10] : memref<128x128xbf16, #tpu.memory_space<vmem>>, vector<128x128xbf16>
    %c0_11 = arith.constant 0 : index
    %c0_12 = arith.constant 0 : index
    %35 = vector.load %arg5[%c0_11, %c0_12] : memref<1x128xf32, #tpu.memory_space<vmem>>, vector<1x128xf32>
    %36 = arith.truncf %17 : vector<64x128xf32> to vector<64x128xbf16>
    %cst_13 = arith.constant dense<0.000000e+00> : vector<64x128xf32>
    %37 = tpu.matmul %36, %34, %cst_13 {dimension_numbers = #tpu.dot_dimension_numbers<[1], [0], [0], [1], [0, 0, 1, 1], [], []>} : vector<64x128xbf16>, vector<128x128xbf16>, vector<64x128xf32> -> vector<64x128xf32>
    %38 = vector.broadcast %35 : vector<1x128xf32> to vector<64x128xf32>
    %39 = arith.addf %37, %38 : vector<64x128xf32>
    %40 = math.tanh %39 : vector<64x128xf32>
    %41 = arith.mulf %40, %13 : vector<64x128xf32>
    %42 = arith.addf %8, %41 : vector<64x128xf32>
    %43 = arith.truncf %33 : vector<64x128xf32> to vector<64x128xbf16>
    %cst_14 = arith.constant dense<0.000000e+00> : vector<64x128xf32>
    %44 = tpu.matmul %43, %34, %cst_14 {dimension_numbers = #tpu.dot_dimension_numbers<[1], [0], [0], [1], [0, 0, 1, 1], [], []>} : vector<64x128xbf16>, vector<128x128xbf16>, vector<64x128xf32> -> vector<64x128xf32>
    %45 = vector.broadcast %35 : vector<1x128xf32> to vector<64x128xf32>
    %46 = arith.addf %44, %45 : vector<64x128xf32>
    %47 = math.tanh %46 : vector<64x128xf32>
    %48 = arith.mulf %47, %29 : vector<64x128xf32>
    %49 = arith.addf %24, %48 : vector<64x128xf32>
    %c0_15 = arith.constant 0 : index
    %c0_16 = arith.constant 0 : index
    %50 = vector.load %arg6[%c0_15, %c0_16] : memref<128x1xbf16, #tpu.memory_space<vmem>>, vector<128x1xbf16>
    %51 = arith.truncf %42 : vector<64x128xf32> to vector<64x128xbf16>
    %cst_17 = arith.constant dense<0.000000e+00> : vector<64x1xf32>
    %52 = tpu.matmul %51, %50, %cst_17 {dimension_numbers = #tpu.dot_dimension_numbers<[1], [0], [0], [1], [0, 0, 1, 1], [], []>} : vector<64x128xbf16>, vector<128x1xbf16>, vector<64x1xf32> -> vector<64x1xf32>
    %c0_18 = arith.constant 0 : index
    %c0_19 = arith.constant 0 : index
    %53 = vector.load %arg7[%c0_18, %c0_19] : memref<128x1xf32, #tpu.memory_space<vmem>>, vector<64x1xf32>
    tpu.vector_store %arg7[%c0_18, %c0_19], %52 {strides = array<i32>} : memref<128x1xf32, #tpu.memory_space<vmem>>, vector<64x1xf32>,
    %54 = arith.truncf %49 : vector<64x128xf32> to vector<64x128xbf16>
    %cst_20 = arith.constant dense<0.000000e+00> : vector<64x1xf32>
    %55 = tpu.matmul %54, %50, %cst_20 {dimension_numbers = #tpu.dot_dimension_numbers<[1], [0], [0], [1], [0, 0, 1, 1], [], []>} : vector<64x128xbf16>, vector<128x1xbf16>, vector<64x1xf32> -> vector<64x1xf32>
    %c64_21 = arith.constant 64 : index
    %c0_22 = arith.constant 0 : index
    %56 = vector.load %arg7[%c64_21, %c0_22] : memref<128x1xf32, #tpu.memory_space<vmem>>, vector<64x1xf32>
    tpu.vector_store %arg7[%c64_21, %c0_22], %55 {strides = array<i32>} : memref<128x1xf32, #tpu.memory_space<vmem>>, vector<64x1xf32>,
    return
  }
  func.func @transform_0(%arg0: i32) -> (i32, i32) {
    %c0_i32 = arith.constant 0 : i32
    %c0_i32_0 = arith.constant 0 : i32
    return %arg0, %c0_i32 : i32, i32
  }
  func.func @transform_1(%arg0: i32) -> (i32, i32) {
    %c0_i32 = arith.constant 0 : i32
    %c0_i32_0 = arith.constant 0 : i32
    %c0_i32_1 = arith.constant 0 : i32
    return %c0_i32, %c0_i32_0 : i32, i32
  }
  func.func @transform_2(%arg0: i32) -> (i32, i32) {
    %c0_i32 = arith.constant 0 : i32
    %c0_i32_0 = arith.constant 0 : i32
    %c0_i32_1 = arith.constant 0 : i32
    return %c0_i32, %c0_i32_0 : i32, i32
  }
  func.func @transform_3(%arg0: i32) -> (i32, i32) {
    %c0_i32 = arith.constant 0 : i32
    %c0_i32_0 = arith.constant 0 : i32
    %c0_i32_1 = arith.constant 0 : i32
    return %c0_i32, %c0_i32_0 : i32, i32
  }
  func.func @transform_4(%arg0: i32) -> (i32, i32) {
    %c0_i32 = arith.constant 0 : i32
    %c0_i32_0 = arith.constant 0 : i32
    %c0_i32_1 = arith.constant 0 : i32
    return %c0_i32, %c0_i32_0 : i32, i32
  }
  func.func @transform_5(%arg0: i32) -> (i32, i32) {
    %c0_i32 = arith.constant 0 : i32
    %c0_i32_0 = arith.constant 0 : i32
    %c0_i32_1 = arith.constant 0 : i32
    return %c0_i32, %c0_i32_0 : i32, i32
  }
  func.func @transform_6(%arg0: i32) -> (i32, i32) {
    %c0_i32 = arith.constant 0 : i32
    %c0_i32_0 = arith.constant 0 : i32
    return %arg0, %c0_i32 : i32, i32
  }
}

module attributes {stable_mosaic.version = 11 : i64} {
  func.func @kernel(%arg0: i32, %arg1: memref<128x2xf32, #tpu.memory_space<vmem>>, %arg2: memref<2x384xbf16, #tpu.memory_space<vmem>>, %arg3: memref<1x384xf32, #tpu.memory_space<vmem>>, %arg4: memref<128x128xbf16, #tpu.memory_space<vmem>>, %arg5: memref<1x128xf32, #tpu.memory_space<vmem>>, %arg6: memref<128x1xbf16, #tpu.memory_space<vmem>>, %arg7: memref<128x1xf32, #tpu.memory_space<vmem>>) attributes {dimension_semantics = [#tpu.dimension_semantics<parallel>], iteration_bounds = array<i64: 2>, scalar_prefetch = 0 : i64, scratch_operands = 0 : i64, tpu.core_type = #tpu.core_type<tc>, window_params = [{transform_indices = @transform_0, window_bounds = array<i64: 128, 2>}, {pipeline_mode = #tpu.pipeline_mode<synchronous>, transform_indices = @transform_1, window_bounds = array<i64: 2, 384>}, {pipeline_mode = #tpu.pipeline_mode<synchronous>, transform_indices = @transform_2, window_bounds = array<i64: 1, 384>}, {pipeline_mode = #tpu.pipeline_mode<synchronous>, transform_indices = @transform_3, window_bounds = array<i64: 128, 128>}, {pipeline_mode = #tpu.pipeline_mode<synchronous>, transform_indices = @transform_4, window_bounds = array<i64: 1, 128>}, {pipeline_mode = #tpu.pipeline_mode<synchronous>, transform_indices = @transform_5, window_bounds = array<i64: 128, 1>}, {transform_indices = @transform_6, window_bounds = array<i64: 128, 1>}]} {
    %c0 = arith.constant 0 : index
    %c0_0 = arith.constant 0 : index
    %0 = vector.load %arg2[%c0, %c0_0] : memref<2x384xbf16, #tpu.memory_space<vmem>>, vector<2x384xbf16>
    %c0_1 = arith.constant 0 : index
    %c0_2 = arith.constant 0 : index
    %1 = vector.load %arg3[%c0_1, %c0_2] : memref<1x384xf32, #tpu.memory_space<vmem>>, vector<1x384xf32>
    %c0_3 = arith.constant 0 : index
    %c0_4 = arith.constant 0 : index
    %2 = vector.load %arg1[%c0_3, %c0_4] : memref<128x2xf32, #tpu.memory_space<vmem>>, vector<64x2xf32>
    %3 = arith.truncf %2 : vector<64x2xf32> to vector<64x2xbf16>
    %cst = arith.constant dense<0.000000e+00> : vector<64x384xf32>
    %4 = tpu.matmul %3, %0, %cst {dimension_numbers = #tpu.dot_dimension_numbers<[1], [0], [0], [1], [0, 0, 1, 1], [], []>} : vector<64x2xbf16>, vector<2x384xbf16>, vector<64x384xf32> -> vector<64x384xf32>
    %5 = vector.broadcast %1 : vector<1x384xf32> to vector<64x384xf32>
    %6 = arith.addf %4, %5 : vector<64x384xf32>
    %7 = vector.extract_strided_slice %6 {offsets = [0, 0], sizes = [64, 128], strides = [1, 1]} : vector<64x384xf32> to vector<64x128xf32>
    %8 = math.tanh %7 : vector<64x128xf32>
    %9 = vector.extract_strided_slice %6 {offsets = [0, 128], sizes = [64, 128], strides = [1, 1]} : vector<64x384xf32> to vector<64x128xf32>
    %10 = math.tanh %9 : vector<64x128xf32>
    %11 = arith.subf %10, %8 : vector<64x128xf32>
    %cst_5 = arith.constant 5.000000e-01 : f32
    %12 = vector.broadcast %cst_5 : f32 to vector<64x128xf32>
    %13 = arith.mulf %12, %11 : vector<64x128xf32>
    %14 = vector.extract_strided_slice %6 {offsets = [0, 256], sizes = [64, 128], strides = [1, 1]} : vector<64x384xf32> to vector<64x128xf32>
    %15 = math.tanh %14 : vector<64x128xf32>
    %16 = arith.mulf %15, %13 : vector<64x128xf32>
    %17 = arith.addf %8, %16 : vector<64x128xf32>
    %c64 = arith.constant 64 : index
    %c0_6 = arith.constant 0 : index
    %18 = vector.load %arg1[%c64, %c0_6] : memref<128x2xf32, #tpu.memory_space<vmem>>, vector<64x2xf32>
    %19 = arith.truncf %18 : vector<64x2xf32> to vector<64x2xbf16>
    %cst_7 = arith.constant dense<0.000000e+00> : vector<64x384xf32>
    %20 = tpu.matmul %19, %0, %cst_7 {dimension_numbers = #tpu.dot_dimension_numbers<[1], [0], [0], [1], [0, 0, 1, 1], [], []>} : vector<64x2xbf16>, vector<2x384xbf16>, vector<64x384xf32> -> vector<64x384xf32>
    %21 = vector.broadcast %1 : vector<1x384xf32> to vector<64x384xf32>
    %22 = arith.addf %20, %21 : vector<64x384xf32>
    %23 = vector.extract_strided_slice %22 {offsets = [0, 0], sizes = [64, 128], strides = [1, 1]} : vector<64x384xf32> to vector<64x128xf32>
    %24 = math.tanh %23 : vector<64x128xf32>
    %25 = vector.extract_strided_slice %22 {offsets = [0, 128], sizes = [64, 128], strides = [1, 1]} : vector<64x384xf32> to vector<64x128xf32>
    %26 = math.tanh %25 : vector<64x128xf32>
    %27 = arith.subf %26, %24 : vector<64x128xf32>
    %cst_8 = arith.constant 5.000000e-01 : f32
    %28 = vector.broadcast %cst_8 : f32 to vector<64x128xf32>
    %29 = arith.mulf %28, %27 : vector<64x128xf32>
    %30 = vector.extract_strided_slice %22 {offsets = [0, 256], sizes = [64, 128], strides = [1, 1]} : vector<64x384xf32> to vector<64x128xf32>
    %31 = math.tanh %30 : vector<64x128xf32>
    %32 = arith.mulf %31, %29 : vector<64x128xf32>
    %33 = arith.addf %24, %32 : vector<64x128xf32>
    %c0_9 = arith.constant 0 : index
    %c0_10 = arith.constant 0 : index
    %34 = vector.load %arg4[%c0_9, %c0_10] : memref<128x128xbf16, #tpu.memory_space<vmem>>, vector<128x128xbf16>
    %c0_11 = arith.constant 0 : index
    %c0_12 = arith.constant 0 : index
    %35 = vector.load %arg5[%c0_11, %c0_12] : memref<1x128xf32, #tpu.memory_space<vmem>>, vector<1x128xf32>
    %36 = arith.truncf %17 : vector<64x128xf32> to vector<64x128xbf16>
    %cst_13 = arith.constant dense<0.000000e+00> : vector<64x128xf32>
    %37 = tpu.matmul %36, %34, %cst_13 {dimension_numbers = #tpu.dot_dimension_numbers<[1], [0], [0], [1], [0, 0, 1, 1], [], []>} : vector<64x128xbf16>, vector<128x128xbf16>, vector<64x128xf32> -> vector<64x128xf32>
    %38 = vector.broadcast %35 : vector<1x128xf32> to vector<64x128xf32>
    %39 = arith.addf %37, %38 : vector<64x128xf32>
    %40 = math.tanh %39 : vector<64x128xf32>
    %41 = arith.mulf %40, %13 : vector<64x128xf32>
    %42 = arith.addf %8, %41 : vector<64x128xf32>
    %43 = arith.truncf %33 : vector<64x128xf32> to vector<64x128xbf16>
    %cst_14 = arith.constant dense<0.000000e+00> : vector<64x128xf32>
    %44 = tpu.matmul %43, %34, %cst_14 {dimension_numbers = #tpu.dot_dimension_numbers<[1], [0], [0], [1], [0, 0, 1, 1], [], []>} : vector<64x128xbf16>, vector<128x128xbf16>, vector<64x128xf32> -> vector<64x128xf32>
    %45 = vector.broadcast %35 : vector<1x128xf32> to vector<64x128xf32>
    %46 = arith.addf %44, %45 : vector<64x128xf32>
    %47 = math.tanh %46 : vector<64x128xf32>
    %48 = arith.mulf %47, %29 : vector<64x128xf32>
    %49 = arith.addf %24, %48 : vector<64x128xf32>
    %c0_15 = arith.constant 0 : index
    %c0_16 = arith.constant 0 : index
    %50 = vector.load %arg6[%c0_15, %c0_16] : memref<128x1xbf16, #tpu.memory_space<vmem>>, vector<128x1xbf16>
    %51 = arith.truncf %42 : vector<64x128xf32> to vector<64x128xbf16>
    %cst_17 = arith.constant dense<0.000000e+00> : vector<64x1xf32>
    %52 = tpu.matmul %51, %50, %cst_17 {dimension_numbers = #tpu.dot_dimension_numbers<[1], [0], [0], [1], [0, 0, 1, 1], [], []>} : vector<64x128xbf16>, vector<128x1xbf16>, vector<64x1xf32> -> vector<64x1xf32>
    %c0_18 = arith.constant 0 : index
    %c0_19 = arith.constant 0 : index
    %53 = vector.load %arg7[%c0_18, %c0_19] : memref<128x1xf32, #tpu.memory_space<vmem>>, vector<64x1xf32>
    tpu.vector_store %arg7[%c0_18, %c0_19], %52 {strides = array<i32>} : memref<128x1xf32, #tpu.memory_space<vmem>>, vector<64x1xf32>,
    %54 = arith.truncf %49 : vector<64x128xf32> to vector<64x128xbf16>
    %cst_20 = arith.constant dense<0.000000e+00> : vector<64x1xf32>
    %55 = tpu.matmul %54, %50, %cst_20 {dimension_numbers = #tpu.dot_dimension_numbers<[1], [0], [0], [1], [0, 0, 1, 1], [], []>} : vector<64x128xbf16>, vector<128x1xbf16>, vector<64x1xf32> -> vector<64x1xf32>
    %c64_21 = arith.constant 64 : index
    %c0_22 = arith.constant 0 : index
    %56 = vector.load %arg7[%c64_21, %c0_22] : memref<128x1xf32, #tpu.memory_space<vmem>>, vector<64x1xf32>
    tpu.vector_store %arg7[%c64_21, %c0_22], %55 {strides = array<i32>} : memref<128x1xf32, #tpu.memory_space<vmem>>, vector<64x1xf32>,
    return
  }
  func.func @transform_0(%arg0: i32) -> (i32, i32) {
    %c0_i32 = arith.constant 0 : i32
    %c0_i32_0 = arith.constant 0 : i32
    return %arg0, %c0_i32 : i32, i32
  }
  func.func @transform_1(%arg0: i32) -> (i32, i32) {
    %c0_i32 = arith.constant 0 : i32
    %c0_i32_0 = arith.constant 0 : i32
    %c0_i32_1 = arith.constant 0 : i32
    return %c0_i32, %c0_i32_0 : i32, i32
  }
  func.func @transform_2(%arg0: i32) -> (i32, i32) {
    %c0_i32 = arith.constant 0 : i32
    %c0_i32_0 = arith.constant 0 : i32
    %c0_i32_1 = arith.constant 0 : i32
    return %c0_i32, %c0_i32_0 : i32, i32
  }
  func.func @transform_3(%arg0: i32) -> (i32, i32) {
    %c0_i32 = arith.constant 0 : i32
    %c0_i32_0 = arith.constant 0 : i32
    %c0_i32_1 = arith.constant 0 : i32
    return %c0_i32, %c0_i32_0 : i32, i32
  }
  func.func @transform_4(%arg0: i32) -> (i32, i32) {
    %c0_i32 = arith.constant 0 : i32
    %c0_i32_0 = arith.constant 0 : i32
    %c0_i32_1 = arith.constant 0 : i32
    return %c0_i32, %c0_i32_0 : i32, i32
  }
  func.func @transform_5(%arg0: i32) -> (i32, i32) {
    %c0_i32 = arith.constant 0 : i32
    %c0_i32_0 = arith.constant 0 : i32
    %c0_i32_1 = arith.constant 0 : i32
    return %c0_i32, %c0_i32_0 : i32, i32
  }
  func.func @transform_6(%arg0: i32) -> (i32, i32) {
    %c0_i32 = arith.constant 0 : i32
    %c0_i32_0 = arith.constant 0 : i32
    return %arg0, %c0_i32 : i32, i32
  }
}

</mosaic_0001>

<llo_original>
// kernel: tpu_custom_call.1
$region0: #{tpu_custom_call.1}
  #allocation0 [shape = 'u32[]', space=smem, size = 0x4, offset = 0x4, fixed_abs, tag = 'smem constant byte address 0x4 - core index']
  #allocation1 [shape = 'u32[72,128]{1,0:T(1,128)}', space=vmem, size = 0x9000, scoped, tag = 'internal scratch']
  %s0 = inlined_call_operand.vmem [shape: f32[256,2], index: 0, kind: input, shape index: {}]
  %s1 = inlined_call_operand.vmem [shape: bf16[2,384], index: 1, kind: input, shape index: {}]
  %s2 = inlined_call_operand.vmem [shape: f32[1,384], index: 2, kind: input, shape index: {}]
  %s3 = inlined_call_operand.vmem [shape: bf16[128,128], index: 3, kind: input, shape index: {}]
  %s4 = inlined_call_operand.vmem [shape: f32[1,128], index: 4, kind: input, shape index: {}]
  %s5 = inlined_call_operand.vmem [shape: bf16[128,1], index: 5, kind: input, shape index: {}]
  %s6 = inlined_call_operand.vmem [shape: f32[256,1], index: 6, kind: output, shape index: {}]
  %s7 = sld [smem:[#allocation0]]
  $region57: #{tpu_custom_call.1} parent=0
    _
  %s9 = ssub.s32 1, %s7
  %s10 = scalar_select 0, %s9, %s7
  loop: start=0, step=1, limit=4
  $region2: #{tpu_custom_call.1} parent=0 // loop_pre_header
    _
  $region3: #{tpu_custom_call.1} parent=0 // loop_header
    %s12 = sphi 0, %s16
    %p13 = scmp.ge.s32.totalorder %s12, 4
    %s22 = sphi 0, %s24
    %s25 = sphi 0, %s22
    %s26 = sphi 0, %s25
    %s42 = sphi 0, %s26
    %s46 = sphi 0, %s46
    %s48 = sphi 0, %s46
    %s49 = sphi 0, %s48
    %s63 = sphi 0, %s49
    %s67 = sphi 0, %s67
    %s69 = sphi 0, %s67
    %s70 = sphi 0, %s69
    %s84 = sphi 0, %s70
    %s88 = sphi 0, %s88
    %s90 = sphi 0, %s88
    %s91 = sphi 0, %s90
    %s105 = sphi 0, %s91
    %s109 = sphi 0, %s109
    %s111 = sphi 0, %s109
    %s112 = sphi 0, %s111
    %s126 = sphi 0, %s112
    %s130 = sphi 0, %s130
    %s132 = sphi 0, %s130
    %s133 = sphi 0, %s132
    %s147 = sphi 0, %s133
    %s153 = sphi 0, %s155
    %s156 = sphi 0, %s153
    %s157 = sphi 0, %s156
    %s173 = sphi 0, %s157
  $region4: #{tpu_custom_call.1} parent=0 // loop_header_branch
    %15 = sbr.rel (%p13) target = $region8
  $region5: #{tpu_custom_call.1} parent=0 // loop_body
    %s17 = ssub.s32 %s12, 1
    %s18 = ssub.s32 %s12, 2
    %s19 = sadd.s32 %s12, 1
    %s20 = ssub.s32 %s12, %s19
    %p21 = scmp.eq.s32.totalorder %s20, 0
    %s23 = sadd.s32 %s22, 1
    %s24 = scalar_select %p21, %s22, %s23
    %p27 = pneg %p21
    %p28 = scmp.eq.s32.totalorder %s12, 1
    %p29 = por %p27, %p28
    %p30 = scmp.ne.s32.totalorder %s22, %s25
    %p31 = scmp.eq.s32.totalorder %s12, 0
    %p32 = por %p30, %p31
    %p33 = scmp.ne.s32.totalorder %s22, %s25
    %p34 = scmp.eq.s32.totalorder %s17, 1
    %p35 = por %p33, %p34
    %p36 = scmp.ne.s32.totalorder %s25, %s26
    %p37 = scmp.eq.s32.totalorder %s17, 0
    %p38 = por %p36, %p37
    %p39 = scmp.ne.s32.totalorder %s25, %s26
    %p40 = scmp.eq.s32.totalorder %s18, 1
    %p41 = por %p39, %p40
    %p43 = scmp.ne.s32.totalorder %s26, %s42
    %p44 = scmp.eq.s32.totalorder %s18, 0
    %p45 = por %p43, %p44
    %s47 = sadd.s32 %s46, 1
    %p50 = scmp.eq.s32.totalorder %s12, 1
    %p51 = scmp.ne.s32.totalorder %s46, %s48
    %p52 = scmp.eq.s32.totalorder %s12, 0
    %p53 = por %p51, %p52
    %p54 = scmp.ne.s32.totalorder %s46, %s48
    %p55 = scmp.eq.s32.totalorder %s17, 1
    %p56 = por %p54, %p55
    %p57 = scmp.ne.s32.totalorder %s48, %s49
    %p58 = scmp.eq.s32.totalorder %s17, 0
    %p59 = por %p57, %p58
    %p60 = scmp.ne.s32.totalorder %s48, %s49
    %p61 = scmp.eq.s32.totalorder %s18, 1
    %p62 = por %p60, %p61
    %p64 = scmp.ne.s32.totalorder %s49, %s63
    %p65 = scmp.eq.s32.totalorder %s18, 0
    %p66 = por %p64, %p65
    %s68 = sadd.s32 %s67, 1
    %p71 = scmp.eq.s32.totalorder %s12, 1
    %p72 = scmp.ne.s32.totalorder %s67, %s69
    %p73 = scmp.eq.s32.totalorder %s12, 0
    %p74 = por %p72, %p73
    %p75 = scmp.ne.s32.totalorder %s67, %s69
    %p76 = scmp.eq.s32.totalorder %s17, 1
    %p77 = por %p75, %p76
    %p78 = scmp.ne.s32.totalorder %s69, %s70
    %p79 = scmp.eq.s32.totalorder %s17, 0
    %p80 = por %p78, %p79
    %p81 = scmp.ne.s32.totalorder %s69, %s70
    %p82 = scmp.eq.s32.totalorder %s18, 1
    %p83 = por %p81, %p82
    %p85 = scmp.ne.s32.totalorder %s70, %s84
    %p86 = scmp.eq.s32.totalorder %s18, 0
    %p87 = por %p85, %p86
    %s89 = sadd.s32 %s88, 1
    %p92 = scmp.eq.s32.totalorder %s12, 1
    %p93 = scmp.ne.s32.totalorder %s88, %s90
    %p94 = scmp.eq.s32.totalorder %s12, 0
    %p95 = por %p93, %p94
    %p96 = scmp.ne.s32.totalorder %s88, %s90
    %p97 = scmp.eq.s32.totalorder %s17, 1
    %p98 = por %p96, %p97
    %p99 = scmp.ne.s32.totalorder %s90, %s91
    %p100 = scmp.eq.s32.totalorder %s17, 0
    %p101 = por %p99, %p100
    %p102 = scmp.ne.s32.totalorder %s90, %s91
    %p103 = scmp.eq.s32.totalorder %s18, 1
    %p104 = por %p102, %p103
    %p106 = scmp.ne.s32.totalorder %s91, %s105
    %p107 = scmp.eq.s32.totalorder %s18, 0
    %p108 = por %p106, %p107
    %s110 = sadd.s32 %s109, 1
    %p113 = scmp.eq.s32.totalorder %s12, 1
    %p114 = scmp.ne.s32.totalorder %s109, %s111
    %p115 = scmp.eq.s32.totalorder %s12, 0
    %p116 = por %p114, %p115
    %p117 = scmp.ne.s32.totalorder %s109, %s111
    %p118 = scmp.eq.s32.totalorder %s17, 1
    %p119 = por %p117, %p118
    %p120 = scmp.ne.s32.totalorder %s111, %s112
    %p121 = scmp.eq.s32.totalorder %s17, 0
    %p122 = por %p120, %p121
    %p123 = scmp.ne.s32.totalorder %s111, %s112
    %p124 = scmp.eq.s32.totalorder %s18, 1
    %p125 = por %p123, %p124
    %p127 = scmp.ne.s32.totalorder %s112, %s126
    %p128 = scmp.eq.s32.totalorder %s18, 0
    %p129 = por %p127, %p128
    %s131 = sadd.s32 %s130, 1
    %p134 = scmp.eq.s32.totalorder %s12, 1
    %p135 = scmp.ne.s32.totalorder %s130, %s132
    %p136 = scmp.eq.s32.totalorder %s12, 0
    %p137 = por %p135, %p136
    %p138 = scmp.ne.s32.totalorder %s130, %s132
    %p139 = scmp.eq.s32.totalorder %s17, 1
    %p140 = por %p138, %p139
    %p141 = scmp.ne.s32.totalorder %s132, %s133
    %p142 = scmp.eq.s32.totalorder %s17, 0
    %p143 = por %p141, %p142
    %p144 = scmp.ne.s32.totalorder %s132, %s133
    %p145 = scmp.eq.s32.totalorder %s18, 1
    %p146 = por %p144, %p145
    %p148 = scmp.ne.s32.totalorder %s133, %s147
    %p149 = scmp.eq.s32.totalorder %s18, 0
    %p150 = por %p148, %p149
    %s151 = ssub.s32 %s12, %s19
    %p152 = scmp.eq.s32.totalorder %s151, 0
    %s154 = sadd.s32 %s153, 1
    %s155 = scalar_select %p152, %s153, %s154
    %p158 = pneg %p152
    %p159 = scmp.eq.s32.totalorder %s12, 1
    %p160 = por %p158, %p159
    %p161 = scmp.ne.s32.totalorder %s153, %s156
    %p162 = scmp.eq.s32.totalorder %s12, 0
    %p163 = por %p161, %p162
    %p164 = scmp.ne.s32.totalorder %s153, %s156
    %p165 = scmp.eq.s32.totalorder %s17, 1
    %p166 = por %p164, %p165
    %p167 = scmp.ne.s32.totalorder %s156, %s157
    %p168 = scmp.eq.s32.totalorder %s17, 0
    %p169 = por %p167, %p168
    %p170 = scmp.ne.s32.totalorder %s156, %s157
    %p171 = scmp.eq.s32.totalorder %s18, 1
    %p172 = por %p170, %p171
    %p174 = scmp.ne.s32.totalorder %s157, %s173
    %p175 = scmp.eq.s32.totalorder %s18, 0
    %p176 = por %p174, %p175
    %p177 = scmp.le.s32.totalorder 1, %s12
    %p178 = scmp.lt.s32.totalorder %s12, 3
    %p179 = pnand %p177, %p178
    %p180 = pneg %p179
    // Predicated region
    $region9: #{tpu_custom_call.1} parent=5 // pred_check
      _
    $region10: #{tpu_custom_call.1} parent=5 // pred_check_branch
      %182 = sbr.rel (%p179) target = $region12
    $region11: #{tpu_custom_call.1} parent=5 // pred_region
      %s183 = ssub.s32 %s12, 1
      // Predicated region
      $region13: #{tpu_custom_call.1} parent=11 // pred_check
        %p184 = pneg %p59
      $region14: #{tpu_custom_call.1} parent=11 // pred_check_branch
        %186 = sbr.rel (%p184) target = $region16
      $region15: #{tpu_custom_call.1} parent=11 // pred_region
        _
      $region16: #{tpu_custom_call.1} parent=11 // pred_fallthru
        _
      // Predicated region
      $region17: #{tpu_custom_call.1} parent=11 // pred_check
        %p187 = pneg %p80
      $region18: #{tpu_custom_call.1} parent=11 // pred_check_branch
        %189 = sbr.rel (%p187) target = $region20
      $region19: #{tpu_custom_call.1} parent=11 // pred_region
        _
      $region20: #{tpu_custom_call.1} parent=11 // pred_fallthru
        _
      // Predicated region
      $region21: #{tpu_custom_call.1} parent=11 // pred_check
        %p190 = pneg %p101
      $region22: #{tpu_custom_call.1} parent=11 // pred_check_branch
        %192 = sbr.rel (%p190) target = $region24
      $region23: #{tpu_custom_call.1} parent=11 // pred_region
        _
      $region24: #{tpu_custom_call.1} parent=11 // pred_fallthru
        _
      // Predicated region
      $region25: #{tpu_custom_call.1} parent=11 // pred_check
        %p193 = pneg %p122
      $region26: #{tpu_custom_call.1} parent=11 // pred_check_branch
        %195 = sbr.rel (%p193) target = $region28
      $region27: #{tpu_custom_call.1} parent=11 // pred_region
        _
      $region28: #{tpu_custom_call.1} parent=11 // pred_fallthru
        _
      // Predicated region
      $region29: #{tpu_custom_call.1} parent=11 // pred_check
        %p196 = pneg %p143
      $region30: #{tpu_custom_call.1} parent=11 // pred_check_branch
        %198 = sbr.rel (%p196) target = $region32
      $region31: #{tpu_custom_call.1} parent=11 // pred_region
        _
      $region32: #{tpu_custom_call.1} parent=11 // pred_fallthru
        _
    $region12: #{tpu_custom_call.1} parent=5 // pred_fallthru
      _
    %p199 = scmp.lt.s32.totalorder %s12, 2
    // Predicated region
    $region33: #{tpu_custom_call.1} parent=5 // pred_check
      %p200 = pneg %p199
    $region34: #{tpu_custom_call.1} parent=5 // pred_check_branch
      %202 = sbr.rel (%p200) target = $region36
    $region35: #{tpu_custom_call.1} parent=5 // pred_region
      // Predicated region
      $region37: #{tpu_custom_call.1} parent=35 // pred_check
        %p203 = pneg %p32
      $region38: #{tpu_custom_call.1} parent=35 // pred_check_branch
        %205 = sbr.rel (%p203) target = $region40
      $region39: #{tpu_custom_call.1} parent=35 // pred_region
        %s206 = smul.u32 16, %s12
        %p207 = scmp.lt.s32.totalorder %s206, 31
        %s208 = scalar_select %p207, %s206, 31
        %s209 = smul.addr %s208, 8
        %s210 = scalar_lea.vmem %s0, %s209
        %s211 = smul.u32 16, %s12
      $region40: #{tpu_custom_call.1} parent=35 // pred_fallthru
        _
    $region36: #{tpu_custom_call.1} parent=5 // pred_fallthru
      _
    %p212 = scmp.le.s32.totalorder 1, %s12
    %p213 = scmp.lt.s32.totalorder %s12, 3
    %p214 = pnand %p212, %p213
    %p215 = pneg %p214
    // Predicated region
    $region41: #{tpu_custom_call.1} parent=5 // pred_check
      _
    $region42: #{tpu_custom_call.1} parent=5 // pred_check_branch
      %217 = sbr.rel (%p214) target = $region44
    $region43: #{tpu_custom_call.1} parent=5 // pred_region
      %s218 = ssub.s32 %s12, 1
      %s219 = smul.u32 16, %s17
      %p220 = scmp.lt.s32.totalorder %s219, 31
      %s221 = scalar_select %p220, %s219, 31
      %s222 = smul.addr %s221, 8
      %s223 = scalar_lea.vmem %s0, %s222
      %p224 = pneg %p38
      %p225 = pneg %p35
      %p226 = pneg %p59
      %p227 = pneg %p56
      %p228 = pneg %p80
      %p229 = pneg %p77
      %p230 = pneg %p101
      %p231 = pneg %p98
      %p232 = pneg %p122
      %p233 = pneg %p119
      %p234 = pneg %p143
      %p235 = pneg %p140
      %p236 = pneg %p169
      %p237 = pneg %p166
      %s238 = smul.u32 16, %s17
      %p239 = scmp.lt.s32.totalorder %s238, 31
      %s240 = scalar_select %p239, %s238, 31
      %s241 = smul.addr %s240, 8
      %s242 = scalar_lea.vmem %s6, %s241
      %s243 = smul.u32 16, %s17
      %p244 = scmp.lt.s32.totalorder %s243, 31
      %s245 = scalar_select %p244, %s243, 31
      %s246 = smul.addr %s245, 8
      %s247 = scalar_lea.vmem %s0, %s246
      %s248 = smul.u32 16, %s17
      %s249 = smul.u32 16, %s17
      %p250 = scmp.lt.s32.totalorder %s249, 31
      %s251 = scalar_select %p250, %s249, 31
      %s252 = smul.addr %s251, 8
      %s253 = scalar_lea.vmem %s6, %s252
      %s254 = smul.u32 16, %s17
      %v256 = vld [vmem:[%s1] sm:$0x7]
      %v257 = vld [vmem:[%s2] sm:$0x7]
      %v258 = vld [vmem:[%s247] sm:$0xff]
      %v259 = vld [vmem:[%s247 + $0x8] sm:$0xff]
      %v260 = vld [vmem:[%s247 + $0x10] sm:$0xff]
      %v261 = vld [vmem:[%s247 + $0x18] sm:$0xff]
      %v262 = vld [vmem:[%s247 + $0x20] sm:$0xff]
      %v263 = vld [vmem:[%s247 + $0x28] sm:$0xff]
      %v264 = vld [vmem:[%s247 + $0x30] sm:$0xff]
      %v265 = vld [vmem:[%s247 + $0x38] sm:$0xff]
      %v266 = vpack.c.bf16 %v259, %v258
      %v267 = vpack.c.bf16 %v261, %v260
      %v268 = vpack.c.bf16 %v263, %v262
      %v269 = vpack.c.bf16 %v265, %v264
      %v271 = vperm.slane %v257, 0
      %v272 = vperm.slane %v257, 1
      %v273 = vperm.slane %v257, 2
      %278 = vst [vmem:[#allocation1] ss:$9 sm:$0xff] %v256
      %v279 = vld [vmem:[#allocation1] sm:$0xff]
      %v280 = vld [vmem:[#allocation1 + $0x9] sm:$0xff]
      %v281 = vld [vmem:[#allocation1 + $0x12] sm:$0xff]
      %vm282 = vcmask 15360
      %v284 = vsel %vm282, %v266, 0
      %v287 = vsel %vm282, %v267, 0
      %v290 = vsel %vm282, %v268, 0
      %v293 = vsel %vm282, %v269, 0
      %vm295 = vcmask 1040384
      %v296 = vsel %vm295, %v279, 0
      %v298 = vsel %vm295, %v280, 0
      %v300 = vsel %vm295, %v281, 0
      %302 = vmatpush.bf16.msra.mxu0 0
      %303 = vmatpush.bf16.msra.mxu0 0
      %304 = vmatpush.bf16.msra.mxu0 0
      %305 = vmatpush.bf16.msra.mxu0 0
      %306 = vmatpush.bf16.msra.mxu0 0
      %307 = vmatpush.bf16.msra.mxu0 0
      %308 = vmatpush.bf16.msra.mxu0 0
      %309 = vmatpush.bf16.msra.mxu0 %v296
      %310 = vmatmul.bf16.gmra.mxu0 %v284
      %v311 = vpop.f32.mrf.mxu0
      %v312 = vadd.f32 %v271, %v311
      %v313 = vpop.f32.mrf.mxu0
      %v314 = vadd.f32 %v271, %v313
      %315 = vmatmul.bf16.gmra.mxu0 %v287
      %v316 = vpop.f32.mrf.mxu0
      %v317 = vadd.f32 %v271, %v316
      %v318 = vpop.f32.mrf.mxu0
      %v319 = vadd.f32 %v271, %v318
      %320 = vmatmul.bf16.gmra.mxu0 %v290
      %v321 = vpop.f32.mrf.mxu0
      %v322 = vadd.f32 %v271, %v321
      %v323 = vpop.f32.mrf.mxu0
      %v324 = vadd.f32 %v271, %v323
      %325 = vmatmul.bf16.gmra.mxu0 %v293
      %v326 = vpop.f32.mrf.mxu0
      %v327 = vadd.f32 %v271, %v326
      %v328 = vpop.f32.mrf.mxu0
      %v329 = vadd.f32 %v271, %v328
      %330 = vdwg.mxu0
      %331 = vmatpush.bf16.msra.mxu0 0
      %332 = vmatpush.bf16.msra.mxu0 0
      %333 = vmatpush.bf16.msra.mxu0 0
      %334 = vmatpush.bf16.msra.mxu0 0
      %335 = vmatpush.bf16.msra.mxu0 0
      %336 = vmatpush.bf16.msra.mxu0 0
      %337 = vmatpush.bf16.msra.mxu0 0
      %338 = vmatpush.bf16.msra.mxu0 %v298
      %339 = vmatmul.bf16.gmra.mxu0 %v284
      %v340 = vpop.f32.mrf.mxu0
      %v341 = vadd.f32 %v272, %v340
      %v342 = vpop.f32.mrf.mxu0
      %v343 = vadd.f32 %v272, %v342
      %344 = vmatmul.bf16.gmra.mxu0 %v287
      %v345 = vpop.f32.mrf.mxu0
      %v346 = vadd.f32 %v272, %v345
      %v347 = vpop.f32.mrf.mxu0
      %v348 = vadd.f32 %v272, %v347
      %349 = vmatmul.bf16.gmra.mxu0 %v290
      %v350 = vpop.f32.mrf.mxu0
      %v351 = vadd.f32 %v272, %v350
      %v352 = vpop.f32.mrf.mxu0
      %v353 = vadd.f32 %v272, %v352
      %354 = vmatmul.bf16.gmra.mxu0 %v293
      %v355 = vpop.f32.mrf.mxu0
      %v356 = vadd.f32 %v272, %v355
      %v357 = vpop.f32.mrf.mxu0
      %v358 = vadd.f32 %v272, %v357
      %359 = vdwg.mxu0
      %360 = vmatpush.bf16.msra.mxu0 0
      %361 = vmatpush.bf16.msra.mxu0 0
      %362 = vmatpush.bf16.msra.mxu0 0
      %363 = vmatpush.bf16.msra.mxu0 0
      %364 = vmatpush.bf16.msra.mxu0 0
      %365 = vmatpush.bf16.msra.mxu0 0
      %366 = vmatpush.bf16.msra.mxu0 0
      %367 = vmatpush.bf16.msra.mxu0 %v300
      %368 = vmatmul.bf16.gmra.mxu0 %v284
      %v369 = vpop.f32.mrf.mxu0
      %v370 = vadd.f32 %v273, %v369
      %v371 = vpop.f32.mrf.mxu0
      %v372 = vadd.f32 %v273, %v371
      %373 = vmatmul.bf16.gmra.mxu0 %v287
      %v374 = vpop.f32.mrf.mxu0
      %v375 = vadd.f32 %v273, %v374
      %v376 = vpop.f32.mrf.mxu0
      %v377 = vadd.f32 %v273, %v376
      %378 = vmatmul.bf16.gmra.mxu0 %v290
      %v379 = vpop.f32.mrf.mxu0
      %v380 = vadd.f32 %v273, %v379
      %v381 = vpop.f32.mrf.mxu0
      %v382 = vadd.f32 %v273, %v381
      %383 = vmatmul.bf16.gmra.mxu0 %v293
      %v384 = vpop.f32.mrf.mxu0
      %v385 = vadd.f32 %v273, %v384
      %v386 = vpop.f32.mrf.mxu0
      %v387 = vadd.f32 %v273, %v386
      %388 = vdwg.mxu0
      %v389 = vtanh.pop %v312
      %v390 = vtanh.pop %v314
      %v391 = vtanh.pop %v317
      %v392 = vtanh.pop %v319
      %v393 = vtanh.pop %v322
      %v394 = vtanh.pop %v324
      %v395 = vtanh.pop %v327
      %v396 = vtanh.pop %v329
      %v397 = vtanh.pop %v341
      %v398 = vtanh.pop %v343
      %v399 = vtanh.pop %v346
      %v400 = vtanh.pop %v348
      %v401 = vtanh.pop %v351
      %v402 = vtanh.pop %v353
      %v403 = vtanh.pop %v356
      %v404 = vtanh.pop %v358
      %v405 = vsub.f32 %v397, %v389
      %v406 = vsub.f32 %v398, %v390
      %v407 = vsub.f32 %v399, %v391
      %v408 = vsub.f32 %v400, %v392
      %v409 = vsub.f32 %v401, %v393
      %v410 = vsub.f32 %v402, %v394
      %v411 = vsub.f32 %v403, %v395
      %v412 = vsub.f32 %v404, %v396
      %v413 = vmul.f32 %v405, 0.5
      %v414 = vmul.f32 %v406, 0.5
      %v415 = vmul.f32 %v407, 0.5
      %v416 = vmul.f32 %v408, 0.5
      %v417 = vmul.f32 %v409, 0.5
      %v418 = vmul.f32 %v410, 0.5
      %v419 = vmul.f32 %v411, 0.5
      %v420 = vmul.f32 %v412, 0.5
      %v421 = vtanh.pop %v370
      %v422 = vtanh.pop %v372
      %v423 = vtanh.pop %v375
      %v424 = vtanh.pop %v377
      %v425 = vtanh.pop %v380
      %v426 = vtanh.pop %v382
      %v427 = vtanh.pop %v385
      %v428 = vtanh.pop %v387
      %v429 = vmul.f32 %v421, %v413
      %v430 = vmul.f32 %v422, %v414
      %v431 = vmul.f32 %v423, %v415
      %v432 = vmul.f32 %v424, %v416
      %v433 = vmul.f32 %v425, %v417
      %v434 = vmul.f32 %v426, %v418
      %v435 = vmul.f32 %v427, %v419
      %v436 = vmul.f32 %v428, %v420
      %v437 = vadd.f32 %v389, %v429
      %v438 = vadd.f32 %v390, %v430
      %v439 = vadd.f32 %v391, %v431
      %v440 = vadd.f32 %v392, %v432
      %v441 = vadd.f32 %v393, %v433
      %v442 = vadd.f32 %v394, %v434
      %v443 = vadd.f32 %v395, %v435
      %v444 = vadd.f32 %v396, %v436
      %v445 = vld [vmem:[%s247 + $0x40] sm:$0xff]
      %v446 = vld [vmem:[%s247 + $0x48] sm:$0xff]
      %v447 = vld [vmem:[%s247 + $0x50] sm:$0xff]
      %v448 = vld [vmem:[%s247 + $0x58] sm:$0xff]
      %v449 = vld [vmem:[%s247 + $0x60] sm:$0xff]
      %v450 = vld [vmem:[%s247 + $0x68] sm:$0xff]
      %v451 = vld [vmem:[%s247 + $0x70] sm:$0xff]
      %v452 = vld [vmem:[%s247 + $0x78] sm:$0xff]
      %v453 = vpack.c.bf16 %v446, %v445
      %v454 = vpack.c.bf16 %v448, %v447
      %v455 = vpack.c.bf16 %v450, %v449
      %v456 = vpack.c.bf16 %v452, %v451
      %457 = vst [vmem:[#allocation1] ss:$9 sm:$0xff] %v256
      %v458 = vld [vmem:[#allocation1] sm:$0xff]
      %v459 = vld [vmem:[#allocation1 + $0x9] sm:$0xff]
      %v460 = vld [vmem:[#allocation1 + $0x12] sm:$0xff]
      %v462 = vsel %vm282, %v453, 0
      %v465 = vsel %vm282, %v454, 0
      %v468 = vsel %vm282, %v455, 0
      %v471 = vsel %vm282, %v456, 0
      %v473 = vsel %vm295, %v458, 0
      %v475 = vsel %vm295, %v459, 0
      %v477 = vsel %vm295, %v460, 0
      %479 = vmatpush.bf16.msra.mxu0 0
      %480 = vmatpush.bf16.msra.mxu0 0
      %481 = vmatpush.bf16.msra.mxu0 0
      %482 = vmatpush.bf16.msra.mxu0 0
      %483 = vmatpush.bf16.msra.mxu0 0
      %484 = vmatpush.bf16.msra.mxu0 0
      %485 = vmatpush.bf16.msra.mxu0 0
      %486 = vmatpush.bf16.msra.mxu0 %v473
      %487 = vmatmul.bf16.gmra.mxu0 %v462
      %v488 = vpop.f32.mrf.mxu0
      %v489 = vadd.f32 %v271, %v488
      %v490 = vpop.f32.mrf.mxu0
      %v491 = vadd.f32 %v271, %v490
      %492 = vmatmul.bf16.gmra.mxu0 %v465
      %v493 = vpop.f32.mrf.mxu0
      %v494 = vadd.f32 %v271, %v493
      %v495 = vpop.f32.mrf.mxu0
      %v496 = vadd.f32 %v271, %v495
      %497 = vmatmul.bf16.gmra.mxu0 %v468
      %v498 = vpop.f32.mrf.mxu0
      %v499 = vadd.f32 %v271, %v498
      %v500 = vpop.f32.mrf.mxu0
      %v501 = vadd.f32 %v271, %v500
      %502 = vmatmul.bf16.gmra.mxu0 %v471
      %v503 = vpop.f32.mrf.mxu0
      %v504 = vadd.f32 %v271, %v503
      %v505 = vpop.f32.mrf.mxu0
      %v506 = vadd.f32 %v271, %v505
      %507 = vdwg.mxu0
      %508 = vmatpush.bf16.msra.mxu0 0
      %509 = vmatpush.bf16.msra.mxu0 0
      %510 = vmatpush.bf16.msra.mxu0 0
      %511 = vmatpush.bf16.msra.mxu0 0
      %512 = vmatpush.bf16.msra.mxu0 0
      %513 = vmatpush.bf16.msra.mxu0 0
      %514 = vmatpush.bf16.msra.mxu0 0
      %515 = vmatpush.bf16.msra.mxu0 %v475
      %516 = vmatmul.bf16.gmra.mxu0 %v462
      %v517 = vpop.f32.mrf.mxu0
      %v518 = vadd.f32 %v272, %v517
      %v519 = vpop.f32.mrf.mxu0
      %v520 = vadd.f32 %v272, %v519
      %521 = vmatmul.bf16.gmra.mxu0 %v465
      %v522 = vpop.f32.mrf.mxu0
      %v523 = vadd.f32 %v272, %v522
      %v524 = vpop.f32.mrf.mxu0
      %v525 = vadd.f32 %v272, %v524
      %526 = vmatmul.bf16.gmra.mxu0 %v468
      %v527 = vpop.f32.mrf.mxu0
      %v528 = vadd.f32 %v272, %v527
      %v529 = vpop.f32.mrf.mxu0
      %v530 = vadd.f32 %v272, %v529
      %531 = vmatmul.bf16.gmra.mxu0 %v471
      %v532 = vpop.f32.mrf.mxu0
      %v533 = vadd.f32 %v272, %v532
      %v534 = vpop.f32.mrf.mxu0
      %v535 = vadd.f32 %v272, %v534
      %536 = vdwg.mxu0
      %537 = vmatpush.bf16.msra.mxu0 0
      %538 = vmatpush.bf16.msra.mxu0 0
      %539 = vmatpush.bf16.msra.mxu0 0
      %540 = vmatpush.bf16.msra.mxu0 0
      %541 = vmatpush.bf16.msra.mxu0 0
      %542 = vmatpush.bf16.msra.mxu0 0
      %543 = vmatpush.bf16.msra.mxu0 0
      %544 = vmatpush.bf16.msra.mxu0 %v477
      %545 = vmatmul.bf16.gmra.mxu0 %v462
      %v546 = vpop.f32.mrf.mxu0
      %v547 = vadd.f32 %v273, %v546
      %v548 = vpop.f32.mrf.mxu0
      %v549 = vadd.f32 %v273, %v548
      %550 = vmatmul.bf16.gmra.mxu0 %v465
      %v551 = vpop.f32.mrf.mxu0
      %v552 = vadd.f32 %v273, %v551
      %v553 = vpop.f32.mrf.mxu0
      %v554 = vadd.f32 %v273, %v553
      %555 = vmatmul.bf16.gmra.mxu0 %v468
      %v556 = vpop.f32.mrf.mxu0
      %v557 = vadd.f32 %v273, %v556
      %v558 = vpop.f32.mrf.mxu0
      %v559 = vadd.f32 %v273, %v558
      %560 = vmatmul.bf16.gmra.mxu0 %v471
      %v561 = vpop.f32.mrf.mxu0
      %v562 = vadd.f32 %v273, %v561
      %v563 = vpop.f32.mrf.mxu0
      %v564 = vadd.f32 %v273, %v563
      %565 = vdwg.mxu0
      %v566 = vtanh.pop %v489
      %v567 = vtanh.pop %v491
      %v568 = vtanh.pop %v494
      %v569 = vtanh.pop %v496
      %v570 = vtanh.pop %v499
      %v571 = vtanh.pop %v501
      %v572 = vtanh.pop %v504
      %v573 = vtanh.pop %v506
      %v574 = vtanh.pop %v518
      %v575 = vtanh.pop %v520
      %v576 = vtanh.pop %v523
      %v577 = vtanh.pop %v525
      %v578 = vtanh.pop %v528
      %v579 = vtanh.pop %v530
      %v580 = vtanh.pop %v533
      %v581 = vtanh.pop %v535
      %v582 = vsub.f32 %v574, %v566
      %v583 = vsub.f32 %v575, %v567
      %v584 = vsub.f32 %v576, %v568
      %v585 = vsub.f32 %v577, %v569
      %v586 = vsub.f32 %v578, %v570
      %v587 = vsub.f32 %v579, %v571
      %v588 = vsub.f32 %v580, %v572
      %v589 = vsub.f32 %v581, %v573
      %v590 = vmul.f32 %v582, 0.5
      %v591 = vmul.f32 %v583, 0.5
      %v592 = vmul.f32 %v584, 0.5
      %v593 = vmul.f32 %v585, 0.5
      %v594 = vmul.f32 %v586, 0.5
      %v595 = vmul.f32 %v587, 0.5
      %v596 = vmul.f32 %v588, 0.5
      %v597 = vmul.f32 %v589, 0.5
      %v598 = vtanh.pop %v547
      %v599 = vtanh.pop %v549
      %v600 = vtanh.pop %v552
      %v601 = vtanh.pop %v554
      %v602 = vtanh.pop %v557
      %v603 = vtanh.pop %v559
      %v604 = vtanh.pop %v562
      %v605 = vtanh.pop %v564
      %v606 = vmul.f32 %v598, %v590
      %v607 = vmul.f32 %v599, %v591
      %v608 = vmul.f32 %v600, %v592
      %v609 = vmul.f32 %v601, %v593
      %v610 = vmul.f32 %v602, %v594
      %v611 = vmul.f32 %v603, %v595
      %v612 = vmul.f32 %v604, %v596
      %v613 = vmul.f32 %v605, %v597
      %v614 = vadd.f32 %v566, %v606
      %v615 = vadd.f32 %v567, %v607
      %v616 = vadd.f32 %v568, %v608
      %v617 = vadd.f32 %v569, %v609
      %v618 = vadd.f32 %v570, %v610
      %v619 = vadd.f32 %v571, %v611
      %v620 = vadd.f32 %v572, %v612
      %v621 = vadd.f32 %v573, %v613
      %v622 = vld [vmem:[%s3] sm:$0xf]
      %v623 = vld [vmem:[%s3 + $0x4] sm:$0xf]
      %v624 = vld [vmem:[%s3 + $0x8] sm:$0xf]
      %v625 = vld [vmem:[%s3 + $0xc] sm:$0xf]
      %v626 = vld [vmem:[%s3 + $0x10] sm:$0xf]
      %v627 = vld [vmem:[%s3 + $0x14] sm:$0xf]
      %v628 = vld [vmem:[%s3 + $0x18] sm:$0xf]
      %v629 = vld [vmem:[%s3 + $0x1c] sm:$0xf]
      %v630 = vld [vmem:[%s3 + $0x20] sm:$0xf]
      %v631 = vld [vmem:[%s3 + $0x24] sm:$0xf]
      %v632 = vld [vmem:[%s3 + $0x28] sm:$0xf]
      %v633 = vld [vmem:[%s3 + $0x2c] sm:$0xf]
      %v634 = vld [vmem:[%s3 + $0x30] sm:$0xf]
      %v635 = vld [vmem:[%s3 + $0x34] sm:$0xf]
      %v636 = vld [vmem:[%s3 + $0x38] sm:$0xf]
      %v637 = vld [vmem:[%s3 + $0x3c] sm:$0xf]
      %v638 = vld [vmem:[%s4] sm:$0x1]
      %v639 = vpack.c.bf16 %v438, %v437
      %v640 = vpack.c.bf16 %v440, %v439
      %v641 = vpack.c.bf16 %v442, %v441
      %v642 = vpack.c.bf16 %v444, %v443
      %v644 = vperm.slane %v638, 0
      %v662 = vunpack.c.l.b16 %v622
      %v663 = vunpack.c.l.b16 %v623
      %v664 = vunpack.c.l.b16 %v624
      %v665 = vunpack.c.l.b16 %v625
      %v666 = vunpack.c.l.b16 %v626
      %v667 = vunpack.c.l.b16 %v627
      %v668 = vunpack.c.l.b16 %v628
      %v669 = vunpack.c.l.b16 %v629
      %v670 = vunpack.c.l.b16 %v630
      %v671 = vunpack.c.l.b16 %v631
      %v672 = vunpack.c.l.b16 %v632
      %v673 = vunpack.c.l.b16 %v633
      %v674 = vunpack.c.l.b16 %v634
      %v675 = vunpack.c.l.b16 %v635
      %v676 = vunpack.c.l.b16 %v636
      %v677 = vunpack.c.l.b16 %v637
      %v678 = vpack.c.b16 %v663, %v662
      %v679 = vpack.c.b16 %v665, %v664
      %v680 = vpack.c.b16 %v667, %v666
      %v681 = vpack.c.b16 %v669, %v668
      %v682 = vpack.c.b16 %v671, %v670
      %v683 = vpack.c.b16 %v673, %v672
      %v684 = vpack.c.b16 %v675, %v674
      %v685 = vpack.c.b16 %v677, %v676
      %694 = vmatpush.bf16.msra.mxu0 %v685
      %695 = vmatpush.bf16.msra.mxu0 %v684
      %696 = vmatpush.bf16.msra.mxu0 %v683
      %697 = vmatpush.bf16.msra.mxu0 %v682
      %698 = vmatpush.bf16.msra.mxu0 %v681
      %699 = vmatpush.bf16.msra.mxu0 %v680
      %700 = vmatpush.bf16.msra.mxu0 %v679
      %701 = vmatpush.bf16.msra.mxu0 %v678
      %702 = vmatmul.bf16.gmra.mxu0 %v639
      %v703 = vpop.f32.mrf.mxu0
      %v704 = vadd.f32 %v644, %v703
      %v705 = vpop.f32.mrf.mxu0
      %v706 = vadd.f32 %v644, %v705
      %707 = vmatmul.bf16.gmra.mxu0 %v640
      %v708 = vpop.f32.mrf.mxu0
      %v709 = vadd.f32 %v644, %v708
      %v710 = vpop.f32.mrf.mxu0
      %v711 = vadd.f32 %v644, %v710
      %712 = vmatmul.bf16.gmra.mxu0 %v641
      %v713 = vpop.f32.mrf.mxu0
      %v714 = vadd.f32 %v644, %v713
      %v715 = vpop.f32.mrf.mxu0
      %v716 = vadd.f32 %v644, %v715
      %717 = vmatmul.bf16.gmra.mxu0 %v642
      %v718 = vpop.f32.mrf.mxu0
      %v719 = vadd.f32 %v644, %v718
      %v720 = vpop.f32.mrf.mxu0
      %v721 = vadd.f32 %v644, %v720
      %722 = vdwg.mxu0
      %v723 = vtanh.pop %v704
      %v724 = vtanh.pop %v706
      %v725 = vtanh.pop %v709
      %v726 = vtanh.pop %v711
      %v727 = vtanh.pop %v714
      %v728 = vtanh.pop %v716
      %v729 = vtanh.pop %v719
      %v730 = vtanh.pop %v721
      %v731 = vmul.f32 %v723, %v413
      %v732 = vmul.f32 %v724, %v414
      %v733 = vmul.f32 %v725, %v415
      %v734 = vmul.f32 %v726, %v416
      %v735 = vmul.f32 %v727, %v417
      %v736 = vmul.f32 %v728, %v418
      %v737 = vmul.f32 %v729, %v419
      %v738 = vmul.f32 %v730, %v420
      %v739 = vadd.f32 %v389, %v731
      %v740 = vadd.f32 %v390, %v732
      %v741 = vadd.f32 %v391, %v733
      %v742 = vadd.f32 %v392, %v734
      %v743 = vadd.f32 %v393, %v735
      %v744 = vadd.f32 %v394, %v736
      %v745 = vadd.f32 %v395, %v737
      %v746 = vadd.f32 %v396, %v738
      %v747 = vpack.c.bf16 %v615, %v614
      %v748 = vpack.c.bf16 %v617, %v616
      %v749 = vpack.c.bf16 %v619, %v618
      %v750 = vpack.c.bf16 %v621, %v620
      %751 = vmatpush.bf16.msra.mxu0 %v685
      %752 = vmatpush.bf16.msra.mxu0 %v684
      %753 = vmatpush.bf16.msra.mxu0 %v683
      %754 = vmatpush.bf16.msra.mxu0 %v682
      %755 = vmatpush.bf16.msra.mxu0 %v681
      %756 = vmatpush.bf16.msra.mxu0 %v680
      %757 = vmatpush.bf16.msra.mxu0 %v679
      %758 = vmatpush.bf16.msra.mxu0 %v678
      %759 = vmatmul.bf16.gmra.mxu0 %v747
      %v760 = vpop.f32.mrf.mxu0
      %v761 = vadd.f32 %v644, %v760
      %v762 = vpop.f32.mrf.mxu0
      %v763 = vadd.f32 %v644, %v762
      %764 = vmatmul.bf16.gmra.mxu0 %v748
      %v765 = vpop.f32.mrf.mxu0
      %v766 = vadd.f32 %v644, %v765
      %v767 = vpop.f32.mrf.mxu0
      %v768 = vadd.f32 %v644, %v767
      %769 = vmatmul.bf16.gmra.mxu0 %v749
      %v770 = vpop.f32.mrf.mxu0
      %v771 = vadd.f32 %v644, %v770
      %v772 = vpop.f32.mrf.mxu0
      %v773 = vadd.f32 %v644, %v772
      %774 = vmatmul.bf16.gmra.mxu0 %v750
      %v775 = vpop.f32.mrf.mxu0
      %v776 = vadd.f32 %v644, %v775
      %v777 = vpop.f32.mrf.mxu0
      %v778 = vadd.f32 %v644, %v777
      %779 = vdwg.mxu0
      %v780 = vtanh.pop %v761
      %v781 = vtanh.pop %v763
      %v782 = vtanh.pop %v766
      %v783 = vtanh.pop %v768
      %v784 = vtanh.pop %v771
      %v785 = vtanh.pop %v773
      %v786 = vtanh.pop %v776
      %v787 = vtanh.pop %v778
      %v788 = vmul.f32 %v780, %v590
      %v789 = vmul.f32 %v781, %v591
      %v790 = vmul.f32 %v782, %v592
      %v791 = vmul.f32 %v783, %v593
      %v792 = vmul.f32 %v784, %v594
      %v793 = vmul.f32 %v785, %v595
      %v794 = vmul.f32 %v786, %v596
      %v795 = vmul.f32 %v787, %v597
      %v796 = vadd.f32 %v566, %v788
      %v797 = vadd.f32 %v567, %v789
      %v798 = vadd.f32 %v568, %v790
      %v799 = vadd.f32 %v569, %v791
      %v800 = vadd.f32 %v570, %v792
      %v801 = vadd.f32 %v571, %v793
      %v802 = vadd.f32 %v572, %v794
      %v803 = vadd.f32 %v573, %v795
      %v804 = vld [vmem:[%s5] sm:$0xf]
      %v805 = vld [vmem:[%s5 + $0x4] sm:$0xf]
      %v806 = vld [vmem:[%s5 + $0x8] sm:$0xf]
      %v807 = vld [vmem:[%s5 + $0xc] sm:$0xf]
      %v808 = vld [vmem:[%s5 + $0x10] sm:$0xf]
      %v809 = vld [vmem:[%s5 + $0x14] sm:$0xf]
      %v810 = vld [vmem:[%s5 + $0x18] sm:$0xf]
      %v811 = vld [vmem:[%s5 + $0x1c] sm:$0xf]
      %v812 = vld [vmem:[%s5 + $0x20] sm:$0xf]
      %v813 = vld [vmem:[%s5 + $0x24] sm:$0xf]
      %v814 = vld [vmem:[%s5 + $0x28] sm:$0xf]
      %v815 = vld [vmem:[%s5 + $0x2c] sm:$0xf]
      %v816 = vld [vmem:[%s5 + $0x30] sm:$0xf]
      %v817 = vld [vmem:[%s5 + $0x34] sm:$0xf]
      %v818 = vld [vmem:[%s5 + $0x38] sm:$0xf]
      %v819 = vld [vmem:[%s5 + $0x3c] sm:$0xf]
      %v820 = vpack.c.bf16 %v740, %v739
      %v821 = vpack.c.bf16 %v742, %v741
      %v822 = vpack.c.bf16 %v744, %v743
      %v823 = vpack.c.bf16 %v746, %v745
      %v840 = vunpack.c.l.b16 %v804
      %v841 = vunpack.c.l.b16 %v805
      %v842 = vunpack.c.l.b16 %v806
      %v843 = vunpack.c.l.b16 %v807
      %v844 = vunpack.c.l.b16 %v808
      %v845 = vunpack.c.l.b16 %v809
      %v846 = vunpack.c.l.b16 %v810
      %v847 = vunpack.c.l.b16 %v811
      %v848 = vunpack.c.l.b16 %v812
      %v849 = vunpack.c.l.b16 %v813
      %v850 = vunpack.c.l.b16 %v814
      %v851 = vunpack.c.l.b16 %v815
      %v852 = vunpack.c.l.b16 %v816
      %v853 = vunpack.c.l.b16 %v817
      %v854 = vunpack.c.l.b16 %v818
      %v855 = vunpack.c.l.b16 %v819
      %v856 = vpack.c.b16 %v841, %v840
      %v857 = vpack.c.b16 %v843, %v842
      %v858 = vpack.c.b16 %v845, %v844
      %v859 = vpack.c.b16 %v847, %v846
      %v860 = vpack.c.b16 %v849, %v848
      %v861 = vpack.c.b16 %v851, %v850
      %v862 = vpack.c.b16 %v853, %v852
      %v863 = vpack.c.b16 %v855, %v854
      %872 = vmatpush.bf16.msra.mxu0 %v863
      %873 = vmatpush.bf16.msra.mxu0 %v862
      %874 = vmatpush.bf16.msra.mxu0 %v861
      %875 = vmatpush.bf16.msra.mxu0 %v860
      %876 = vmatpush.bf16.msra.mxu0 %v859
      %877 = vmatpush.bf16.msra.mxu0 %v858
      %878 = vmatpush.bf16.msra.mxu0 %v857
      %879 = vmatpush.bf16.msra.mxu0 %v856
      %880 = vmatmul.bf16.gmra.mxu0 %v820
      %v881 = vpop.f32.mrf.mxu0
      %v882 = vadd.f32 0.0, %v881
      %v883 = vpop.f32.mrf.mxu0
      %v884 = vadd.f32 0.0, %v883
      %885 = vmatmul.bf16.gmra.mxu0 %v821
      %v886 = vpop.f32.mrf.mxu0
      %v887 = vadd.f32 0.0, %v886
      %v888 = vpop.f32.mrf.mxu0
      %v889 = vadd.f32 0.0, %v888
      %890 = vmatmul.bf16.gmra.mxu0 %v822
      %v891 = vpop.f32.mrf.mxu0
      %v892 = vadd.f32 0.0, %v891
      %v893 = vpop.f32.mrf.mxu0
      %v894 = vadd.f32 0.0, %v893
      %895 = vmatmul.bf16.gmra.mxu0 %v823
      %v896 = vpop.f32.mrf.mxu0
      %v897 = vadd.f32 0.0, %v896
      %v898 = vpop.f32.mrf.mxu0
      %v899 = vadd.f32 0.0, %v898
      %900 = vdwg.mxu0
      %vm901 = vcmask 7168
      %902 = vst.msk [vmem:[%s253] sm:$0xff] %vm901, %v882
      %903 = vst.msk [vmem:[%s253 + $0x8] sm:$0xff] %vm901, %v884
      %904 = vst.msk [vmem:[%s253 + $0x10] sm:$0xff] %vm901, %v887
      %905 = vst.msk [vmem:[%s253 + $0x18] sm:$0xff] %vm901, %v889
      %906 = vst.msk [vmem:[%s253 + $0x20] sm:$0xff] %vm901, %v892
      %907 = vst.msk [vmem:[%s253 + $0x28] sm:$0xff] %vm901, %v894
      %908 = vst.msk [vmem:[%s253 + $0x30] sm:$0xff] %vm901, %v897
      %909 = vst.msk [vmem:[%s253 + $0x38] sm:$0xff] %vm901, %v899
      %v910 = vpack.c.bf16 %v797, %v796
      %v911 = vpack.c.bf16 %v799, %v798
      %v912 = vpack.c.bf16 %v801, %v800
      %v913 = vpack.c.bf16 %v803, %v802
      %914 = vmatpush.bf16.msra.mxu0 %v863
      %915 = vmatpush.bf16.msra.mxu0 %v862
      %916 = vmatpush.bf16.msra.mxu0 %v861
      %917 = vmatpush.bf16.msra.mxu0 %v860
      %918 = vmatpush.bf16.msra.mxu0 %v859
      %919 = vmatpush.bf16.msra.mxu0 %v858
      %920 = vmatpush.bf16.msra.mxu0 %v857
      %921 = vmatpush.bf16.msra.mxu0 %v856
      %922 = vmatmul.bf16.gmra.mxu0 %v910
      %v923 = vpop.f32.mrf.mxu0
      %v924 = vadd.f32 0.0, %v923
      %v925 = vpop.f32.mrf.mxu0
      %v926 = vadd.f32 0.0, %v925
      %927 = vmatmul.bf16.gmra.mxu0 %v911
      %v928 = vpop.f32.mrf.mxu0
      %v929 = vadd.f32 0.0, %v928
      %v930 = vpop.f32.mrf.mxu0
      %v931 = vadd.f32 0.0, %v930
      %932 = vmatmul.bf16.gmra.mxu0 %v912
      %v933 = vpop.f32.mrf.mxu0
      %v934 = vadd.f32 0.0, %v933
      %v935 = vpop.f32.mrf.mxu0
      %v936 = vadd.f32 0.0, %v935
      %937 = vmatmul.bf16.gmra.mxu0 %v913
      %v938 = vpop.f32.mrf.mxu0
      %v939 = vadd.f32 0.0, %v938
      %v940 = vpop.f32.mrf.mxu0
      %v941 = vadd.f32 0.0, %v940
      %942 = vdwg.mxu0
      %943 = vst.msk [vmem:[%s253 + $0x40] sm:$0xff] %vm901, %v924
      %944 = vst.msk [vmem:[%s253 + $0x48] sm:$0xff] %vm901, %v926
      %945 = vst.msk [vmem:[%s253 + $0x50] sm:$0xff] %vm901, %v929
      %946 = vst.msk [vmem:[%s253 + $0x58] sm:$0xff] %vm901, %v931
      %947 = vst.msk [vmem:[%s253 + $0x60] sm:$0xff] %vm901, %v934
      %948 = vst.msk [vmem:[%s253 + $0x68] sm:$0xff] %vm901, %v936
      %949 = vst.msk [vmem:[%s253 + $0x70] sm:$0xff] %vm901, %v939
      %950 = vst.msk [vmem:[%s253 + $0x78] sm:$0xff] %vm901, %v941
      %s951 = smul.u32 16, %s17
      %p952 = scmp.lt.s32.totalorder %s951, 31
      %s953 = scalar_select %p952, %s951, 31
      %s954 = smul.addr %s953, 8
      %s955 = scalar_lea.vmem %s6, %s954
      // Predicated region
      $region45: #{tpu_custom_call.1} parent=43 // pred_check
        %p956 = pneg %p166
      $region46: #{tpu_custom_call.1} parent=43 // pred_check_branch
        %958 = sbr.rel (%p956) target = $region48
      $region47: #{tpu_custom_call.1} parent=43 // pred_region
        %s959 = smul.u32 16, %s17
      $region48: #{tpu_custom_call.1} parent=43 // pred_fallthru
        _
    $region44: #{tpu_custom_call.1} parent=5 // pred_fallthru
      _
    %p960 = scmp.le.s32.totalorder 2, %s12
    // Predicated region
    $region49: #{tpu_custom_call.1} parent=5 // pred_check
      %p961 = pneg %p960
    $region50: #{tpu_custom_call.1} parent=5 // pred_check_branch
      %963 = sbr.rel (%p961) target = $region52
    $region51: #{tpu_custom_call.1} parent=5 // pred_region
      %s964 = ssub.s32 %s12, 2
      // Predicated region
      $region53: #{tpu_custom_call.1} parent=51 // pred_check
        %p965 = pneg %p172
      $region54: #{tpu_custom_call.1} parent=51 // pred_check_branch
        %967 = sbr.rel (%p965) target = $region56
      $region55: #{tpu_custom_call.1} parent=51 // pred_region
        %s968 = smul.u32 16, %s18
        %p969 = scmp.lt.s32.totalorder %s968, 31
        %s970 = scalar_select %p969, %s968, 31
        %s971 = smul.addr %s970, 8
        %s972 = scalar_lea.vmem %s6, %s971
      $region56: #{tpu_custom_call.1} parent=51 // pred_fallthru
        _
    $region52: #{tpu_custom_call.1} parent=5 // pred_fallthru
      _
  $region6: #{tpu_custom_call.1} parent=0 // loop_footer
    %s16 = sadd.s32 1, %s12
  $region7: #{tpu_custom_call.1} parent=0 // loop_footer_branch
    %11 = sbr.rel target = $region3
  $region8: #{tpu_custom_call.1} parent=0 // loop_exit
    _

// kernel: tpu_custom_call.1
$region0: #{tpu_custom_call.1}
  #allocation0 [shape = 'u32[]', space=smem, size = 0x4, offset = 0x4, fixed_abs, tag = 'smem constant byte address 0x4 - core index']
  #allocation1 [shape = 'u32[72,128]{1,0:T(1,128)}', space=vmem, size = 0x9000, scoped, tag = 'internal scratch']
  %s0 = inlined_call_operand.vmem [shape: f32[256,2], index: 0, kind: input, shape index: {}]
  %s1 = inlined_call_operand.vmem [shape: bf16[2,384], index: 1, kind: input, shape index: {}]
  %s2 = inlined_call_operand.vmem [shape: f32[1,384], index: 2, kind: input, shape index: {}]
  %s3 = inlined_call_operand.vmem [shape: bf16[128,128], index: 3, kind: input, shape index: {}]
  %s4 = inlined_call_operand.vmem [shape: f32[1,128], index: 4, kind: input, shape index: {}]
  %s5 = inlined_call_operand.vmem [shape: bf16[128,1], index: 5, kind: input, shape index: {}]
  %s6 = inlined_call_operand.vmem [shape: f32[256,1], index: 6, kind: output, shape index: {}]
  %s7 = sld [smem:[#allocation0]]
  $region57: #{tpu_custom_call.1} parent=0
    _
  %s9 = ssub.s32 1, %s7
  %s10 = scalar_select 0, %s9, %s7
  loop: start=0, step=1, limit=4
  $region2: #{tpu_custom_call.1} parent=0 // loop_pre_header
    _
  $region3: #{tpu_custom_call.1} parent=0 // loop_header
    %s12 = sphi 0, %s16
    %p13 = scmp.ge.s32.totalorder %s12, 4
    %s22 = sphi 0, %s24
    %s25 = sphi 0, %s22
    %s26 = sphi 0, %s25
    %s42 = sphi 0, %s26
    %s46 = sphi 0, %s46
    %s48 = sphi 0, %s46
    %s49 = sphi 0, %s48
    %s63 = sphi 0, %s49
    %s67 = sphi 0, %s67
    %s69 = sphi 0, %s67
    %s70 = sphi 0, %s69
    %s84 = sphi 0, %s70
    %s88 = sphi 0, %s88
    %s90 = sphi 0, %s88
    %s91 = sphi 0, %s90
    %s105 = sphi 0, %s91
    %s109 = sphi 0, %s109
    %s111 = sphi 0, %s109
    %s112 = sphi 0, %s111
    %s126 = sphi 0, %s112
    %s130 = sphi 0, %s130
    %s132 = sphi 0, %s130
    %s133 = sphi 0, %s132
    %s147 = sphi 0, %s133
    %s153 = sphi 0, %s155
    %s156 = sphi 0, %s153
    %s157 = sphi 0, %s156
    %s173 = sphi 0, %s157
  $region4: #{tpu_custom_call.1} parent=0 // loop_header_branch
    %15 = sbr.rel (%p13) target = $region8
  $region5: #{tpu_custom_call.1} parent=0 // loop_body
    %s17 = ssub.s32 %s12, 1
    %s18 = ssub.s32 %s12, 2
    %s19 = sadd.s32 %s12, 1
    %s20 = ssub.s32 %s12, %s19
    %p21 = scmp.eq.s32.totalorder %s20, 0
    %s23 = sadd.s32 %s22, 1
    %s24 = scalar_select %p21, %s22, %s23
    %p27 = pneg %p21
    %p28 = scmp.eq.s32.totalorder %s12, 1
    %p29 = por %p27, %p28
    %p30 = scmp.ne.s32.totalorder %s22, %s25
    %p31 = scmp.eq.s32.totalorder %s12, 0
    %p32 = por %p30, %p31
    %p33 = scmp.ne.s32.totalorder %s22, %s25
    %p34 = scmp.eq.s32.totalorder %s17, 1
    %p35 = por %p33, %p34
    %p36 = scmp.ne.s32.totalorder %s25, %s26
    %p37 = scmp.eq.s32.totalorder %s17, 0
    %p38 = por %p36, %p37
    %p39 = scmp.ne.s32.totalorder %s25, %s26
    %p40 = scmp.eq.s32.totalorder %s18, 1
    %p41 = por %p39, %p40
    %p43 = scmp.ne.s32.totalorder %s26, %s42
    %p44 = scmp.eq.s32.totalorder %s18, 0
    %p45 = por %p43, %p44
    %s47 = sadd.s32 %s46, 1
    %p50 = scmp.eq.s32.totalorder %s12, 1
    %p51 = scmp.ne.s32.totalorder %s46, %s48
    %p52 = scmp.eq.s32.totalorder %s12, 0
    %p53 = por %p51, %p52
    %p54 = scmp.ne.s32.totalorder %s46, %s48
    %p55 = scmp.eq.s32.totalorder %s17, 1
    %p56 = por %p54, %p55
    %p57 = scmp.ne.s32.totalorder %s48, %s49
    %p58 = scmp.eq.s32.totalorder %s17, 0
    %p59 = por %p57, %p58
    %p60 = scmp.ne.s32.totalorder %s48, %s49
    %p61 = scmp.eq.s32.totalorder %s18, 1
    %p62 = por %p60, %p61
    %p64 = scmp.ne.s32.totalorder %s49, %s63
    %p65 = scmp.eq.s32.totalorder %s18, 0
    %p66 = por %p64, %p65
    %s68 = sadd.s32 %s67, 1
    %p71 = scmp.eq.s32.totalorder %s12, 1
    %p72 = scmp.ne.s32.totalorder %s67, %s69
    %p73 = scmp.eq.s32.totalorder %s12, 0
    %p74 = por %p72, %p73
    %p75 = scmp.ne.s32.totalorder %s67, %s69
    %p76 = scmp.eq.s32.totalorder %s17, 1
    %p77 = por %p75, %p76
    %p78 = scmp.ne.s32.totalorder %s69, %s70
    %p79 = scmp.eq.s32.totalorder %s17, 0
    %p80 = por %p78, %p79
    %p81 = scmp.ne.s32.totalorder %s69, %s70
    %p82 = scmp.eq.s32.totalorder %s18, 1
    %p83 = por %p81, %p82
    %p85 = scmp.ne.s32.totalorder %s70, %s84
    %p86 = scmp.eq.s32.totalorder %s18, 0
    %p87 = por %p85, %p86
    %s89 = sadd.s32 %s88, 1
    %p92 = scmp.eq.s32.totalorder %s12, 1
    %p93 = scmp.ne.s32.totalorder %s88, %s90
    %p94 = scmp.eq.s32.totalorder %s12, 0
    %p95 = por %p93, %p94
    %p96 = scmp.ne.s32.totalorder %s88, %s90
    %p97 = scmp.eq.s32.totalorder %s17, 1
    %p98 = por %p96, %p97
    %p99 = scmp.ne.s32.totalorder %s90, %s91
    %p100 = scmp.eq.s32.totalorder %s17, 0
    %p101 = por %p99, %p100
    %p102 = scmp.ne.s32.totalorder %s90, %s91
    %p103 = scmp.eq.s32.totalorder %s18, 1
    %p104 = por %p102, %p103
    %p106 = scmp.ne.s32.totalorder %s91, %s105
    %p107 = scmp.eq.s32.totalorder %s18, 0
    %p108 = por %p106, %p107
    %s110 = sadd.s32 %s109, 1
    %p113 = scmp.eq.s32.totalorder %s12, 1
    %p114 = scmp.ne.s32.totalorder %s109, %s111
    %p115 = scmp.eq.s32.totalorder %s12, 0
    %p116 = por %p114, %p115
    %p117 = scmp.ne.s32.totalorder %s109, %s111
    %p118 = scmp.eq.s32.totalorder %s17, 1
    %p119 = por %p117, %p118
    %p120 = scmp.ne.s32.totalorder %s111, %s112
    %p121 = scmp.eq.s32.totalorder %s17, 0
    %p122 = por %p120, %p121
    %p123 = scmp.ne.s32.totalorder %s111, %s112
    %p124 = scmp.eq.s32.totalorder %s18, 1
    %p125 = por %p123, %p124
    %p127 = scmp.ne.s32.totalorder %s112, %s126
    %p128 = scmp.eq.s32.totalorder %s18, 0
    %p129 = por %p127, %p128
    %s131 = sadd.s32 %s130, 1
    %p134 = scmp.eq.s32.totalorder %s12, 1
    %p135 = scmp.ne.s32.totalorder %s130, %s132
    %p136 = scmp.eq.s32.totalorder %s12, 0
    %p137 = por %p135, %p136
    %p138 = scmp.ne.s32.totalorder %s130, %s132
    %p139 = scmp.eq.s32.totalorder %s17, 1
    %p140 = por %p138, %p139
    %p141 = scmp.ne.s32.totalorder %s132, %s133
    %p142 = scmp.eq.s32.totalorder %s17, 0
    %p143 = por %p141, %p142
    %p144 = scmp.ne.s32.totalorder %s132, %s133
    %p145 = scmp.eq.s32.totalorder %s18, 1
    %p146 = por %p144, %p145
    %p148 = scmp.ne.s32.totalorder %s133, %s147
    %p149 = scmp.eq.s32.totalorder %s18, 0
    %p150 = por %p148, %p149
    %s151 = ssub.s32 %s12, %s19
    %p152 = scmp.eq.s32.totalorder %s151, 0
    %s154 = sadd.s32 %s153, 1
    %s155 = scalar_select %p152, %s153, %s154
    %p158 = pneg %p152
    %p159 = scmp.eq.s32.totalorder %s12, 1
    %p160 = por %p158, %p159
    %p161 = scmp.ne.s32.totalorder %s153, %s156
    %p162 = scmp.eq.s32.totalorder %s12, 0
    %p163 = por %p161, %p162
    %p164 = scmp.ne.s32.totalorder %s153, %s156
    %p165 = scmp.eq.s32.totalorder %s17, 1
    %p166 = por %p164, %p165
    %p167 = scmp.ne.s32.totalorder %s156, %s157
    %p168 = scmp.eq.s32.totalorder %s17, 0
    %p169 = por %p167, %p168
    %p170 = scmp.ne.s32.totalorder %s156, %s157
    %p171 = scmp.eq.s32.totalorder %s18, 1
    %p172 = por %p170, %p171
    %p174 = scmp.ne.s32.totalorder %s157, %s173
    %p175 = scmp.eq.s32.totalorder %s18, 0
    %p176 = por %p174, %p175
    %p177 = scmp.le.s32.totalorder 1, %s12
    %p178 = scmp.lt.s32.totalorder %s12, 3
    %p179 = pnand %p177, %p178
    %p180 = pneg %p179
    // Predicated region
    $region9: #{tpu_custom_call.1} parent=5 // pred_check
      _
    $region10: #{tpu_custom_call.1} parent=5 // pred_check_branch
      %182 = sbr.rel (%p179) target = $region12
    $region11: #{tpu_custom_call.1} parent=5 // pred_region
      %s183 = ssub.s32 %s12, 1
      // Predicated region
      $region13: #{tpu_custom_call.1} parent=11 // pred_check
        %p184 = pneg %p59
      $region14: #{tpu_custom_call.1} parent=11 // pred_check_branch
        %186 = sbr.rel (%p184) target = $region16
      $region15: #{tpu_custom_call.1} parent=11 // pred_region
        _
      $region16: #{tpu_custom_call.1} parent=11 // pred_fallthru
        _
      // Predicated region
      $region17: #{tpu_custom_call.1} parent=11 // pred_check
        %p187 = pneg %p80
      $region18: #{tpu_custom_call.1} parent=11 // pred_check_branch
        %189 = sbr.rel (%p187) target = $region20
      $region19: #{tpu_custom_call.1} parent=11 // pred_region
        _
      $region20: #{tpu_custom_call.1} parent=11 // pred_fallthru
        _
      // Predicated region
      $region21: #{tpu_custom_call.1} parent=11 // pred_check
        %p190 = pneg %p101
      $region22: #{tpu_custom_call.1} parent=11 // pred_check_branch
        %192 = sbr.rel (%p190) target = $region24
      $region23: #{tpu_custom_call.1} parent=11 // pred_region
        _
      $region24: #{tpu_custom_call.1} parent=11 // pred_fallthru
        _
      // Predicated region
      $region25: #{tpu_custom_call.1} parent=11 // pred_check
        %p193 = pneg %p122
      $region26: #{tpu_custom_call.1} parent=11 // pred_check_branch
        %195 = sbr.rel (%p193) target = $region28
      $region27: #{tpu_custom_call.1} parent=11 // pred_region
        _
      $region28: #{tpu_custom_call.1} parent=11 // pred_fallthru
        _
      // Predicated region
      $region29: #{tpu_custom_call.1} parent=11 // pred_check
        %p196 = pneg %p143
      $region30: #{tpu_custom_call.1} parent=11 // pred_check_branch
        %198 = sbr.rel (%p196) target = $region32
      $region31: #{tpu_custom_call.1} parent=11 // pred_region
        _
      $region32: #{tpu_custom_call.1} parent=11 // pred_fallthru
        _
    $region12: #{tpu_custom_call.1} parent=5 // pred_fallthru
      _
    %p199 = scmp.lt.s32.totalorder %s12, 2
    // Predicated region
    $region33: #{tpu_custom_call.1} parent=5 // pred_check
      %p200 = pneg %p199
    $region34: #{tpu_custom_call.1} parent=5 // pred_check_branch
      %202 = sbr.rel (%p200) target = $region36
    $region35: #{tpu_custom_call.1} parent=5 // pred_region
      // Predicated region
      $region37: #{tpu_custom_call.1} parent=35 // pred_check
        %p203 = pneg %p32
      $region38: #{tpu_custom_call.1} parent=35 // pred_check_branch
        %205 = sbr.rel (%p203) target = $region40
      $region39: #{tpu_custom_call.1} parent=35 // pred_region
        %s206 = smul.u32 16, %s12
        %p207 = scmp.lt.s32.totalorder %s206, 31
        %s208 = scalar_select %p207, %s206, 31
        %s209 = smul.addr %s208, 8
        %s210 = scalar_lea.vmem %s0, %s209
        %s211 = smul.u32 16, %s12
      $region40: #{tpu_custom_call.1} parent=35 // pred_fallthru
        _
    $region36: #{tpu_custom_call.1} parent=5 // pred_fallthru
      _
    %p212 = scmp.le.s32.totalorder 1, %s12
    %p213 = scmp.lt.s32.totalorder %s12, 3
    %p214 = pnand %p212, %p213
    %p215 = pneg %p214
    // Predicated region
    $region41: #{tpu_custom_call.1} parent=5 // pred_check
      _
    $region42: #{tpu_custom_call.1} parent=5 // pred_check_branch
      %217 = sbr.rel (%p214) target = $region44
    $region43: #{tpu_custom_call.1} parent=5 // pred_region
      %s218 = ssub.s32 %s12, 1
      %s219 = smul.u32 16, %s17
      %p220 = scmp.lt.s32.totalorder %s219, 31
      %s221 = scalar_select %p220, %s219, 31
      %s222 = smul.addr %s221, 8
      %s223 = scalar_lea.vmem %s0, %s222
      %p224 = pneg %p38
      %p225 = pneg %p35
      %p226 = pneg %p59
      %p227 = pneg %p56
      %p228 = pneg %p80
      %p229 = pneg %p77
      %p230 = pneg %p101
      %p231 = pneg %p98
      %p232 = pneg %p122
      %p233 = pneg %p119
      %p234 = pneg %p143
      %p235 = pneg %p140
      %p236 = pneg %p169
      %p237 = pneg %p166
      %s238 = smul.u32 16, %s17
      %p239 = scmp.lt.s32.totalorder %s238, 31
      %s240 = scalar_select %p239, %s238, 31
      %s241 = smul.addr %s240, 8
      %s242 = scalar_lea.vmem %s6, %s241
      %s243 = smul.u32 16, %s17
      %p244 = scmp.lt.s32.totalorder %s243, 31
      %s245 = scalar_select %p244, %s243, 31
      %s246 = smul.addr %s245, 8
      %s247 = scalar_lea.vmem %s0, %s246
      %s248 = smul.u32 16, %s17
      %s249 = smul.u32 16, %s17
      %p250 = scmp.lt.s32.totalorder %s249, 31
      %s251 = scalar_select %p250, %s249, 31
      %s252 = smul.addr %s251, 8
      %s253 = scalar_lea.vmem %s6, %s252
      %s254 = smul.u32 16, %s17
      %v256 = vld [vmem:[%s1] sm:$0x7]
      %v257 = vld [vmem:[%s2] sm:$0x7]
      %v258 = vld [vmem:[%s247] sm:$0xff]
      %v259 = vld [vmem:[%s247 + $0x8] sm:$0xff]
      %v260 = vld [vmem:[%s247 + $0x10] sm:$0xff]
      %v261 = vld [vmem:[%s247 + $0x18] sm:$0xff]
      %v262 = vld [vmem:[%s247 + $0x20] sm:$0xff]
      %v263 = vld [vmem:[%s247 + $0x28] sm:$0xff]
      %v264 = vld [vmem:[%s247 + $0x30] sm:$0xff]
      %v265 = vld [vmem:[%s247 + $0x38] sm:$0xff]
      %v266 = vpack.c.bf16 %v259, %v258
      %v267 = vpack.c.bf16 %v261, %v260
      %v268 = vpack.c.bf16 %v263, %v262
      %v269 = vpack.c.bf16 %v265, %v264
      %v271 = vperm.slane %v257, 0
      %v272 = vperm.slane %v257, 1
      %v273 = vperm.slane %v257, 2
      %278 = vst [vmem:[#allocation1] ss:$9 sm:$0xff] %v256
      %v279 = vld [vmem:[#allocation1] sm:$0xff]
      %v280 = vld [vmem:[#allocation1 + $0x9] sm:$0xff]
      %v281 = vld [vmem:[#allocation1 + $0x12] sm:$0xff]
      %vm282 = vcmask 15360
      %v284 = vsel %vm282, %v266, 0
      %v287 = vsel %vm282, %v267, 0
      %v290 = vsel %vm282, %v268, 0
      %v293 = vsel %vm282, %v269, 0
      %vm295 = vcmask 1040384
      %v296 = vsel %vm295, %v279, 0
      %v298 = vsel %vm295, %v280, 0
      %v300 = vsel %vm295, %v281, 0
      %302 = vmatpush.bf16.msra.mxu0 0
      %303 = vmatpush.bf16.msra.mxu0 0
      %304 = vmatpush.bf16.msra.mxu0 0
      %305 = vmatpush.bf16.msra.mxu0 0
      %306 = vmatpush.bf16.msra.mxu0 0
      %307 = vmatpush.bf16.msra.mxu0 0
      %308 = vmatpush.bf16.msra.mxu0 0
      %309 = vmatpush.bf16.msra.mxu0 %v296
      %310 = vmatmul.bf16.gmra.mxu0 %v284
      %v311 = vpop.f32.mrf.mxu0
      %v312 = vadd.f32 %v271, %v311
      %v313 = vpop.f32.mrf.mxu0
      %v314 = vadd.f32 %v271, %v313
      %315 = vmatmul.bf16.gmra.mxu0 %v287
      %v316 = vpop.f32.mrf.mxu0
      %v317 = vadd.f32 %v271, %v316
      %v318 = vpop.f32.mrf.mxu0
      %v319 = vadd.f32 %v271, %v318
      %320 = vmatmul.bf16.gmra.mxu0 %v290
      %v321 = vpop.f32.mrf.mxu0
      %v322 = vadd.f32 %v271, %v321
      %v323 = vpop.f32.mrf.mxu0
      %v324 = vadd.f32 %v271, %v323
      %325 = vmatmul.bf16.gmra.mxu0 %v293
      %v326 = vpop.f32.mrf.mxu0
      %v327 = vadd.f32 %v271, %v326
      %v328 = vpop.f32.mrf.mxu0
      %v329 = vadd.f32 %v271, %v328
      %330 = vdwg.mxu0
      %331 = vmatpush.bf16.msra.mxu0 0
      %332 = vmatpush.bf16.msra.mxu0 0
      %333 = vmatpush.bf16.msra.mxu0 0
      %334 = vmatpush.bf16.msra.mxu0 0
      %335 = vmatpush.bf16.msra.mxu0 0
      %336 = vmatpush.bf16.msra.mxu0 0
      %337 = vmatpush.bf16.msra.mxu0 0
      %338 = vmatpush.bf16.msra.mxu0 %v298
      %339 = vmatmul.bf16.gmra.mxu0 %v284
      %v340 = vpop.f32.mrf.mxu0
      %v341 = vadd.f32 %v272, %v340
      %v342 = vpop.f32.mrf.mxu0
      %v343 = vadd.f32 %v272, %v342
      %344 = vmatmul.bf16.gmra.mxu0 %v287
      %v345 = vpop.f32.mrf.mxu0
      %v346 = vadd.f32 %v272, %v345
      %v347 = vpop.f32.mrf.mxu0
      %v348 = vadd.f32 %v272, %v347
      %349 = vmatmul.bf16.gmra.mxu0 %v290
      %v350 = vpop.f32.mrf.mxu0
      %v351 = vadd.f32 %v272, %v350
      %v352 = vpop.f32.mrf.mxu0
      %v353 = vadd.f32 %v272, %v352
      %354 = vmatmul.bf16.gmra.mxu0 %v293
      %v355 = vpop.f32.mrf.mxu0
      %v356 = vadd.f32 %v272, %v355
      %v357 = vpop.f32.mrf.mxu0
      %v358 = vadd.f32 %v272, %v357
      %359 = vdwg.mxu0
      %360 = vmatpush.bf16.msra.mxu0 0
      %361 = vmatpush.bf16.msra.mxu0 0
      %362 = vmatpush.bf16.msra.mxu0 0
      %363 = vmatpush.bf16.msra.mxu0 0
      %364 = vmatpush.bf16.msra.mxu0 0
      %365 = vmatpush.bf16.msra.mxu0 0
      %366 = vmatpush.bf16.msra.mxu0 0
      %367 = vmatpush.bf16.msra.mxu0 %v300
      %368 = vmatmul.bf16.gmra.mxu0 %v284
      %v369 = vpop.f32.mrf.mxu0
      %v370 = vadd.f32 %v273, %v369
      %v371 = vpop.f32.mrf.mxu0
      %v372 = vadd.f32 %v273, %v371
      %373 = vmatmul.bf16.gmra.mxu0 %v287
      %v374 = vpop.f32.mrf.mxu0
      %v375 = vadd.f32 %v273, %v374
      %v376 = vpop.f32.mrf.mxu0
      %v377 = vadd.f32 %v273, %v376
      %378 = vmatmul.bf16.gmra.mxu0 %v290
      %v379 = vpop.f32.mrf.mxu0
      %v380 = vadd.f32 %v273, %v379
      %v381 = vpop.f32.mrf.mxu0
      %v382 = vadd.f32 %v273, %v381
      %383 = vmatmul.bf16.gmra.mxu0 %v293
      %v384 = vpop.f32.mrf.mxu0
      %v385 = vadd.f32 %v273, %v384
      %v386 = vpop.f32.mrf.mxu0
      %v387 = vadd.f32 %v273, %v386
      %388 = vdwg.mxu0
      %v389 = vtanh.pop %v312
      %v390 = vtanh.pop %v314
      %v391 = vtanh.pop %v317
      %v392 = vtanh.pop %v319
      %v393 = vtanh.pop %v322
      %v394 = vtanh.pop %v324
      %v395 = vtanh.pop %v327
      %v396 = vtanh.pop %v329
      %v397 = vtanh.pop %v341
      %v398 = vtanh.pop %v343
      %v399 = vtanh.pop %v346
      %v400 = vtanh.pop %v348
      %v401 = vtanh.pop %v351
      %v402 = vtanh.pop %v353
      %v403 = vtanh.pop %v356
      %v404 = vtanh.pop %v358
      %v405 = vsub.f32 %v397, %v389
      %v406 = vsub.f32 %v398, %v390
      %v407 = vsub.f32 %v399, %v391
      %v408 = vsub.f32 %v400, %v392
      %v409 = vsub.f32 %v401, %v393
      %v410 = vsub.f32 %v402, %v394
      %v411 = vsub.f32 %v403, %v395
      %v412 = vsub.f32 %v404, %v396
      %v413 = vmul.f32 %v405, 0.5
      %v414 = vmul.f32 %v406, 0.5
      %v415 = vmul.f32 %v407, 0.5
      %v416 = vmul.f32 %v408, 0.5
      %v417 = vmul.f32 %v409, 0.5
      %v418 = vmul.f32 %v410, 0.5
      %v419 = vmul.f32 %v411, 0.5
      %v420 = vmul.f32 %v412, 0.5
      %v421 = vtanh.pop %v370
      %v422 = vtanh.pop %v372
      %v423 = vtanh.pop %v375
      %v424 = vtanh.pop %v377
      %v425 = vtanh.pop %v380
      %v426 = vtanh.pop %v382
      %v427 = vtanh.pop %v385
      %v428 = vtanh.pop %v387
      %v429 = vmul.f32 %v421, %v413
      %v430 = vmul.f32 %v422, %v414
      %v431 = vmul.f32 %v423, %v415
      %v432 = vmul.f32 %v424, %v416
      %v433 = vmul.f32 %v425, %v417
      %v434 = vmul.f32 %v426, %v418
      %v435 = vmul.f32 %v427, %v419
      %v436 = vmul.f32 %v428, %v420
      %v437 = vadd.f32 %v389, %v429
      %v438 = vadd.f32 %v390, %v430
      %v439 = vadd.f32 %v391, %v431
      %v440 = vadd.f32 %v392, %v432
      %v441 = vadd.f32 %v393, %v433
      %v442 = vadd.f32 %v394, %v434
      %v443 = vadd.f32 %v395, %v435
      %v444 = vadd.f32 %v396, %v436
      %v445 = vld [vmem:[%s247 + $0x40] sm:$0xff]
      %v446 = vld [vmem:[%s247 + $0x48] sm:$0xff]
      %v447 = vld [vmem:[%s247 + $0x50] sm:$0xff]
      %v448 = vld [vmem:[%s247 + $0x58] sm:$0xff]
      %v449 = vld [vmem:[%s247 + $0x60] sm:$0xff]
      %v450 = vld [vmem:[%s247 + $0x68] sm:$0xff]
      %v451 = vld [vmem:[%s247 + $0x70] sm:$0xff]
      %v452 = vld [vmem:[%s247 + $0x78] sm:$0xff]
      %v453 = vpack.c.bf16 %v446, %v445
      %v454 = vpack.c.bf16 %v448, %v447
      %v455 = vpack.c.bf16 %v450, %v449
      %v456 = vpack.c.bf16 %v452, %v451
      %457 = vst [vmem:[#allocation1] ss:$9 sm:$0xff] %v256
      %v458 = vld [vmem:[#allocation1] sm:$0xff]
      %v459 = vld [vmem:[#allocation1 + $0x9] sm:$0xff]
      %v460 = vld [vmem:[#allocation1 + $0x12] sm:$0xff]
      %v462 = vsel %vm282, %v453, 0
      %v465 = vsel %vm282, %v454, 0
      %v468 = vsel %vm282, %v455, 0
      %v471 = vsel %vm282, %v456, 0
      %v473 = vsel %vm295, %v458, 0
      %v475 = vsel %vm295, %v459, 0
      %v477 = vsel %vm295, %v460, 0
      %479 = vmatpush.bf16.msra.mxu0 0
      %480 = vmatpush.bf16.msra.mxu0 0
      %481 = vmatpush.bf16.msra.mxu0 0
      %482 = vmatpush.bf16.msra.mxu0 0
      %483 = vmatpush.bf16.msra.mxu0 0
      %484 = vmatpush.bf16.msra.mxu0 0
      %485 = vmatpush.bf16.msra.mxu0 0
      %486 = vmatpush.bf16.msra.mxu0 %v473
      %487 = vmatmul.bf16.gmra.mxu0 %v462
      %v488 = vpop.f32.mrf.mxu0
      %v489 = vadd.f32 %v271, %v488
      %v490 = vpop.f32.mrf.mxu0
      %v491 = vadd.f32 %v271, %v490
      %492 = vmatmul.bf16.gmra.mxu0 %v465
      %v493 = vpop.f32.mrf.mxu0
      %v494 = vadd.f32 %v271, %v493
      %v495 = vpop.f32.mrf.mxu0
      %v496 = vadd.f32 %v271, %v495
      %497 = vmatmul.bf16.gmra.mxu0 %v468
      %v498 = vpop.f32.mrf.mxu0
      %v499 = vadd.f32 %v271, %v498
      %v500 = vpop.f32.mrf.mxu0
      %v501 = vadd.f32 %v271, %v500
      %502 = vmatmul.bf16.gmra.mxu0 %v471
      %v503 = vpop.f32.mrf.mxu0
      %v504 = vadd.f32 %v271, %v503
      %v505 = vpop.f32.mrf.mxu0
      %v506 = vadd.f32 %v271, %v505
      %507 = vdwg.mxu0
      %508 = vmatpush.bf16.msra.mxu0 0
      %509 = vmatpush.bf16.msra.mxu0 0
      %510 = vmatpush.bf16.msra.mxu0 0
      %511 = vmatpush.bf16.msra.mxu0 0
      %512 = vmatpush.bf16.msra.mxu0 0
      %513 = vmatpush.bf16.msra.mxu0 0
      %514 = vmatpush.bf16.msra.mxu0 0
      %515 = vmatpush.bf16.msra.mxu0 %v475
      %516 = vmatmul.bf16.gmra.mxu0 %v462
      %v517 = vpop.f32.mrf.mxu0
      %v518 = vadd.f32 %v272, %v517
      %v519 = vpop.f32.mrf.mxu0
      %v520 = vadd.f32 %v272, %v519
      %521 = vmatmul.bf16.gmra.mxu0 %v465
      %v522 = vpop.f32.mrf.mxu0
      %v523 = vadd.f32 %v272, %v522
      %v524 = vpop.f32.mrf.mxu0
      %v525 = vadd.f32 %v272, %v524
      %526 = vmatmul.bf16.gmra.mxu0 %v468
      %v527 = vpop.f32.mrf.mxu0
      %v528 = vadd.f32 %v272, %v527
      %v529 = vpop.f32.mrf.mxu0
      %v530 = vadd.f32 %v272, %v529
      %531 = vmatmul.bf16.gmra.mxu0 %v471
      %v532 = vpop.f32.mrf.mxu0
      %v533 = vadd.f32 %v272, %v532
      %v534 = vpop.f32.mrf.mxu0
      %v535 = vadd.f32 %v272, %v534
      %536 = vdwg.mxu0
      %537 = vmatpush.bf16.msra.mxu0 0
      %538 = vmatpush.bf16.msra.mxu0 0
      %539 = vmatpush.bf16.msra.mxu0 0
      %540 = vmatpush.bf16.msra.mxu0 0
      %541 = vmatpush.bf16.msra.mxu0 0
      %542 = vmatpush.bf16.msra.mxu0 0
      %543 = vmatpush.bf16.msra.mxu0 0
      %544 = vmatpush.bf16.msra.mxu0 %v477
      %545 = vmatmul.bf16.gmra.mxu0 %v462
      %v546 = vpop.f32.mrf.mxu0
      %v547 = vadd.f32 %v273, %v546
      %v548 = vpop.f32.mrf.mxu0
      %v549 = vadd.f32 %v273, %v548
      %550 = vmatmul.bf16.gmra.mxu0 %v465
      %v551 = vpop.f32.mrf.mxu0
      %v552 = vadd.f32 %v273, %v551
      %v553 = vpop.f32.mrf.mxu0
      %v554 = vadd.f32 %v273, %v553
      %555 = vmatmul.bf16.gmra.mxu0 %v468
      %v556 = vpop.f32.mrf.mxu0
      %v557 = vadd.f32 %v273, %v556
      %v558 = vpop.f32.mrf.mxu0
      %v559 = vadd.f32 %v273, %v558
      %560 = vmatmul.bf16.gmra.mxu0 %v471
      %v561 = vpop.f32.mrf.mxu0
      %v562 = vadd.f32 %v273, %v561
      %v563 = vpop.f32.mrf.mxu0
      %v564 = vadd.f32 %v273, %v563
      %565 = vdwg.mxu0
      %v566 = vtanh.pop %v489
      %v567 = vtanh.pop %v491
      %v568 = vtanh.pop %v494
      %v569 = vtanh.pop %v496
      %v570 = vtanh.pop %v499
      %v571 = vtanh.pop %v501
      %v572 = vtanh.pop %v504
      %v573 = vtanh.pop %v506
      %v574 = vtanh.pop %v518
      %v575 = vtanh.pop %v520
      %v576 = vtanh.pop %v523
      %v577 = vtanh.pop %v525
      %v578 = vtanh.pop %v528
      %v579 = vtanh.pop %v530
      %v580 = vtanh.pop %v533
      %v581 = vtanh.pop %v535
      %v582 = vsub.f32 %v574, %v566
      %v583 = vsub.f32 %v575, %v567
      %v584 = vsub.f32 %v576, %v568
      %v585 = vsub.f32 %v577, %v569
      %v586 = vsub.f32 %v578, %v570
      %v587 = vsub.f32 %v579, %v571
      %v588 = vsub.f32 %v580, %v572
      %v589 = vsub.f32 %v581, %v573
      %v590 = vmul.f32 %v582, 0.5
      %v591 = vmul.f32 %v583, 0.5
      %v592 = vmul.f32 %v584, 0.5
      %v593 = vmul.f32 %v585, 0.5
      %v594 = vmul.f32 %v586, 0.5
      %v595 = vmul.f32 %v587, 0.5
      %v596 = vmul.f32 %v588, 0.5
      %v597 = vmul.f32 %v589, 0.5
      %v598 = vtanh.pop %v547
      %v599 = vtanh.pop %v549
      %v600 = vtanh.pop %v552
      %v601 = vtanh.pop %v554
      %v602 = vtanh.pop %v557
      %v603 = vtanh.pop %v559
      %v604 = vtanh.pop %v562
      %v605 = vtanh.pop %v564
      %v606 = vmul.f32 %v598, %v590
      %v607 = vmul.f32 %v599, %v591
      %v608 = vmul.f32 %v600, %v592
      %v609 = vmul.f32 %v601, %v593
      %v610 = vmul.f32 %v602, %v594
      %v611 = vmul.f32 %v603, %v595
      %v612 = vmul.f32 %v604, %v596
      %v613 = vmul.f32 %v605, %v597
      %v614 = vadd.f32 %v566, %v606
      %v615 = vadd.f32 %v567, %v607
      %v616 = vadd.f32 %v568, %v608
      %v617 = vadd.f32 %v569, %v609
      %v618 = vadd.f32 %v570, %v610
      %v619 = vadd.f32 %v571, %v611
      %v620 = vadd.f32 %v572, %v612
      %v621 = vadd.f32 %v573, %v613
      %v622 = vld [vmem:[%s3] sm:$0xf]
      %v623 = vld [vmem:[%s3 + $0x4] sm:$0xf]
      %v624 = vld [vmem:[%s3 + $0x8] sm:$0xf]
      %v625 = vld [vmem:[%s3 + $0xc] sm:$0xf]
      %v626 = vld [vmem:[%s3 + $0x10] sm:$0xf]
      %v627 = vld [vmem:[%s3 + $0x14] sm:$0xf]
      %v628 = vld [vmem:[%s3 + $0x18] sm:$0xf]
      %v629 = vld [vmem:[%s3 + $0x1c] sm:$0xf]
      %v630 = vld [vmem:[%s3 + $0x20] sm:$0xf]
      %v631 = vld [vmem:[%s3 + $0x24] sm:$0xf]
      %v632 = vld [vmem:[%s3 + $0x28] sm:$0xf]
      %v633 = vld [vmem:[%s3 + $0x2c] sm:$0xf]
      %v634 = vld [vmem:[%s3 + $0x30] sm:$0xf]
      %v635 = vld [vmem:[%s3 + $0x34] sm:$0xf]
      %v636 = vld [vmem:[%s3 + $0x38] sm:$0xf]
      %v637 = vld [vmem:[%s3 + $0x3c] sm:$0xf]
      %v638 = vld [vmem:[%s4] sm:$0x1]
      %v639 = vpack.c.bf16 %v438, %v437
      %v640 = vpack.c.bf16 %v440, %v439
      %v641 = vpack.c.bf16 %v442, %v441
      %v642 = vpack.c.bf16 %v444, %v443
      %v644 = vperm.slane %v638, 0
      %v662 = vunpack.c.l.b16 %v622
      %v663 = vunpack.c.l.b16 %v623
      %v664 = vunpack.c.l.b16 %v624
      %v665 = vunpack.c.l.b16 %v625
      %v666 = vunpack.c.l.b16 %v626
      %v667 = vunpack.c.l.b16 %v627
      %v668 = vunpack.c.l.b16 %v628
      %v669 = vunpack.c.l.b16 %v629
      %v670 = vunpack.c.l.b16 %v630
      %v671 = vunpack.c.l.b16 %v631
      %v672 = vunpack.c.l.b16 %v632
      %v673 = vunpack.c.l.b16 %v633
      %v674 = vunpack.c.l.b16 %v634
      %v675 = vunpack.c.l.b16 %v635
      %v676 = vunpack.c.l.b16 %v636
      %v677 = vunpack.c.l.b16 %v637
      %v678 = vpack.c.b16 %v663, %v662
      %v679 = vpack.c.b16 %v665, %v664
      %v680 = vpack.c.b16 %v667, %v666
      %v681 = vpack.c.b16 %v669, %v668
      %v682 = vpack.c.b16 %v671, %v670
      %v683 = vpack.c.b16 %v673, %v672
      %v684 = vpack.c.b16 %v675, %v674
      %v685 = vpack.c.b16 %v677, %v676
      %694 = vmatpush.bf16.msra.mxu0 %v685
      %695 = vmatpush.bf16.msra.mxu0 %v684
      %696 = vmatpush.bf16.msra.mxu0 %v683
      %697 = vmatpush.bf16.msra.mxu0 %v682
      %698 = vmatpush.bf16.msra.mxu0 %v681
      %699 = vmatpush.bf16.msra.mxu0 %v680
      %700 = vmatpush.bf16.msra.mxu0 %v679
      %701 = vmatpush.bf16.msra.mxu0 %v678
      %702 = vmatmul.bf16.gmra.mxu0 %v639
      %v703 = vpop.f32.mrf.mxu0
      %v704 = vadd.f32 %v644, %v703
      %v705 = vpop.f32.mrf.mxu0
      %v706 = vadd.f32 %v644, %v705
      %707 = vmatmul.bf16.gmra.mxu0 %v640
      %v708 = vpop.f32.mrf.mxu0
      %v709 = vadd.f32 %v644, %v708
      %v710 = vpop.f32.mrf.mxu0
      %v711 = vadd.f32 %v644, %v710
      %712 = vmatmul.bf16.gmra.mxu0 %v641
      %v713 = vpop.f32.mrf.mxu0
      %v714 = vadd.f32 %v644, %v713
      %v715 = vpop.f32.mrf.mxu0
      %v716 = vadd.f32 %v644, %v715
      %717 = vmatmul.bf16.gmra.mxu0 %v642
      %v718 = vpop.f32.mrf.mxu0
      %v719 = vadd.f32 %v644, %v718
      %v720 = vpop.f32.mrf.mxu0
      %v721 = vadd.f32 %v644, %v720
      %722 = vdwg.mxu0
      %v723 = vtanh.pop %v704
      %v724 = vtanh.pop %v706
      %v725 = vtanh.pop %v709
      %v726 = vtanh.pop %v711
      %v727 = vtanh.pop %v714
      %v728 = vtanh.pop %v716
      %v729 = vtanh.pop %v719
      %v730 = vtanh.pop %v721
      %v731 = vmul.f32 %v723, %v413
      %v732 = vmul.f32 %v724, %v414
      %v733 = vmul.f32 %v725, %v415
      %v734 = vmul.f32 %v726, %v416
      %v735 = vmul.f32 %v727, %v417
      %v736 = vmul.f32 %v728, %v418
      %v737 = vmul.f32 %v729, %v419
      %v738 = vmul.f32 %v730, %v420
      %v739 = vadd.f32 %v389, %v731
      %v740 = vadd.f32 %v390, %v732
      %v741 = vadd.f32 %v391, %v733
      %v742 = vadd.f32 %v392, %v734
      %v743 = vadd.f32 %v393, %v735
      %v744 = vadd.f32 %v394, %v736
      %v745 = vadd.f32 %v395, %v737
      %v746 = vadd.f32 %v396, %v738
      %v747 = vpack.c.bf16 %v615, %v614
      %v748 = vpack.c.bf16 %v617, %v616
      %v749 = vpack.c.bf16 %v619, %v618
      %v750 = vpack.c.bf16 %v621, %v620
      %751 = vmatpush.bf16.msra.mxu0 %v685
      %752 = vmatpush.bf16.msra.mxu0 %v684
      %753 = vmatpush.bf16.msra.mxu0 %v683
      %754 = vmatpush.bf16.msra.mxu0 %v682
      %755 = vmatpush.bf16.msra.mxu0 %v681
      %756 = vmatpush.bf16.msra.mxu0 %v680
      %757 = vmatpush.bf16.msra.mxu0 %v679
      %758 = vmatpush.bf16.msra.mxu0 %v678
      %759 = vmatmul.bf16.gmra.mxu0 %v747
      %v760 = vpop.f32.mrf.mxu0
      %v761 = vadd.f32 %v644, %v760
      %v762 = vpop.f32.mrf.mxu0
      %v763 = vadd.f32 %v644, %v762
      %764 = vmatmul.bf16.gmra.mxu0 %v748
      %v765 = vpop.f32.mrf.mxu0
      %v766 = vadd.f32 %v644, %v765
      %v767 = vpop.f32.mrf.mxu0
      %v768 = vadd.f32 %v644, %v767
      %769 = vmatmul.bf16.gmra.mxu0 %v749
      %v770 = vpop.f32.mrf.mxu0
      %v771 = vadd.f32 %v644, %v770
      %v772 = vpop.f32.mrf.mxu0
      %v773 = vadd.f32 %v644, %v772
      %774 = vmatmul.bf16.gmra.mxu0 %v750
      %v775 = vpop.f32.mrf.mxu0
      %v776 = vadd.f32 %v644, %v775
      %v777 = vpop.f32.mrf.mxu0
      %v778 = vadd.f32 %v644, %v777
      %779 = vdwg.mxu0
      %v780 = vtanh.pop %v761
      %v781 = vtanh.pop %v763
      %v782 = vtanh.pop %v766
      %v783 = vtanh.pop %v768
      %v784 = vtanh.pop %v771
      %v785 = vtanh.pop %v773
      %v786 = vtanh.pop %v776
      %v787 = vtanh.pop %v778
      %v788 = vmul.f32 %v780, %v590
      %v789 = vmul.f32 %v781, %v591
      %v790 = vmul.f32 %v782, %v592
      %v791 = vmul.f32 %v783, %v593
      %v792 = vmul.f32 %v784, %v594
      %v793 = vmul.f32 %v785, %v595
      %v794 = vmul.f32 %v786, %v596
      %v795 = vmul.f32 %v787, %v597
      %v796 = vadd.f32 %v566, %v788
      %v797 = vadd.f32 %v567, %v789
      %v798 = vadd.f32 %v568, %v790
      %v799 = vadd.f32 %v569, %v791
      %v800 = vadd.f32 %v570, %v792
      %v801 = vadd.f32 %v571, %v793
      %v802 = vadd.f32 %v572, %v794
      %v803 = vadd.f32 %v573, %v795
      %v804 = vld [vmem:[%s5] sm:$0xf]
      %v805 = vld [vmem:[%s5 + $0x4] sm:$0xf]
      %v806 = vld [vmem:[%s5 + $0x8] sm:$0xf]
      %v807 = vld [vmem:[%s5 + $0xc] sm:$0xf]
      %v808 = vld [vmem:[%s5 + $0x10] sm:$0xf]
      %v809 = vld [vmem:[%s5 + $0x14] sm:$0xf]
      %v810 = vld [vmem:[%s5 + $0x18] sm:$0xf]
      %v811 = vld [vmem:[%s5 + $0x1c] sm:$0xf]
      %v812 = vld [vmem:[%s5 + $0x20] sm:$0xf]
      %v813 = vld [vmem:[%s5 + $0x24] sm:$0xf]
      %v814 = vld [vmem:[%s5 + $0x28] sm:$0xf]
      %v815 = vld [vmem:[%s5 + $0x2c] sm:$0xf]
      %v816 = vld [vmem:[%s5 + $0x30] sm:$0xf]
      %v817 = vld [vmem:[%s5 + $0x34] sm:$0xf]
      %v818 = vld [vmem:[%s5 + $0x38] sm:$0xf]
      %v819 = vld [vmem:[%s5 + $0x3c] sm:$0xf]
      %v820 = vpack.c.bf16 %v740, %v739
      %v821 = vpack.c.bf16 %v742, %v741
      %v822 = vpack.c.bf16 %v744, %v743
      %v823 = vpack.c.bf16 %v746, %v745
      %v840 = vunpack.c.l.b16 %v804
      %v841 = vunpack.c.l.b16 %v805
      %v842 = vunpack.c.l.b16 %v806
      %v843 = vunpack.c.l.b16 %v807
      %v844 = vunpack.c.l.b16 %v808
      %v845 = vunpack.c.l.b16 %v809
      %v846 = vunpack.c.l.b16 %v810
      %v847 = vunpack.c.l.b16 %v811
      %v848 = vunpack.c.l.b16 %v812
      %v849 = vunpack.c.l.b16 %v813
      %v850 = vunpack.c.l.b16 %v814
      %v851 = vunpack.c.l.b16 %v815
      %v852 = vunpack.c.l.b16 %v816
      %v853 = vunpack.c.l.b16 %v817
      %v854 = vunpack.c.l.b16 %v818
      %v855 = vunpack.c.l.b16 %v819
      %v856 = vpack.c.b16 %v841, %v840
      %v857 = vpack.c.b16 %v843, %v842
      %v858 = vpack.c.b16 %v845, %v844
      %v859 = vpack.c.b16 %v847, %v846
      %v860 = vpack.c.b16 %v849, %v848
      %v861 = vpack.c.b16 %v851, %v850
      %v862 = vpack.c.b16 %v853, %v852
      %v863 = vpack.c.b16 %v855, %v854
      %872 = vmatpush.bf16.msra.mxu0 %v863
      %873 = vmatpush.bf16.msra.mxu0 %v862
      %874 = vmatpush.bf16.msra.mxu0 %v861
      %875 = vmatpush.bf16.msra.mxu0 %v860
      %876 = vmatpush.bf16.msra.mxu0 %v859
      %877 = vmatpush.bf16.msra.mxu0 %v858
      %878 = vmatpush.bf16.msra.mxu0 %v857
      %879 = vmatpush.bf16.msra.mxu0 %v856
      %880 = vmatmul.bf16.gmra.mxu0 %v820
      %v881 = vpop.f32.mrf.mxu0
      %v882 = vadd.f32 0.0, %v881
      %v883 = vpop.f32.mrf.mxu0
      %v884 = vadd.f32 0.0, %v883
      %885 = vmatmul.bf16.gmra.mxu0 %v821
      %v886 = vpop.f32.mrf.mxu0
      %v887 = vadd.f32 0.0, %v886
      %v888 = vpop.f32.mrf.mxu0
      %v889 = vadd.f32 0.0, %v888
      %890 = vmatmul.bf16.gmra.mxu0 %v822
      %v891 = vpop.f32.mrf.mxu0
      %v892 = vadd.f32 0.0, %v891
      %v893 = vpop.f32.mrf.mxu0
      %v894 = vadd.f32 0.0, %v893
      %895 = vmatmul.bf16.gmra.mxu0 %v823
      %v896 = vpop.f32.mrf.mxu0
      %v897 = vadd.f32 0.0, %v896
      %v898 = vpop.f32.mrf.mxu0
      %v899 = vadd.f32 0.0, %v898
      %900 = vdwg.mxu0
      %vm901 = vcmask 7168
      %902 = vst.msk [vmem:[%s253] sm:$0xff] %vm901, %v882
      %903 = vst.msk [vmem:[%s253 + $0x8] sm:$0xff] %vm901, %v884
      %904 = vst.msk [vmem:[%s253 + $0x10] sm:$0xff] %vm901, %v887
      %905 = vst.msk [vmem:[%s253 + $0x18] sm:$0xff] %vm901, %v889
      %906 = vst.msk [vmem:[%s253 + $0x20] sm:$0xff] %vm901, %v892
      %907 = vst.msk [vmem:[%s253 + $0x28] sm:$0xff] %vm901, %v894
      %908 = vst.msk [vmem:[%s253 + $0x30] sm:$0xff] %vm901, %v897
      %909 = vst.msk [vmem:[%s253 + $0x38] sm:$0xff] %vm901, %v899
      %v910 = vpack.c.bf16 %v797, %v796
      %v911 = vpack.c.bf16 %v799, %v798
      %v912 = vpack.c.bf16 %v801, %v800
      %v913 = vpack.c.bf16 %v803, %v802
      %914 = vmatpush.bf16.msra.mxu0 %v863
      %915 = vmatpush.bf16.msra.mxu0 %v862
      %916 = vmatpush.bf16.msra.mxu0 %v861
      %917 = vmatpush.bf16.msra.mxu0 %v860
      %918 = vmatpush.bf16.msra.mxu0 %v859
      %919 = vmatpush.bf16.msra.mxu0 %v858
      %920 = vmatpush.bf16.msra.mxu0 %v857
      %921 = vmatpush.bf16.msra.mxu0 %v856
      %922 = vmatmul.bf16.gmra.mxu0 %v910
      %v923 = vpop.f32.mrf.mxu0
      %v924 = vadd.f32 0.0, %v923
      %v925 = vpop.f32.mrf.mxu0
      %v926 = vadd.f32 0.0, %v925
      %927 = vmatmul.bf16.gmra.mxu0 %v911
      %v928 = vpop.f32.mrf.mxu0
      %v929 = vadd.f32 0.0, %v928
      %v930 = vpop.f32.mrf.mxu0
      %v931 = vadd.f32 0.0, %v930
      %932 = vmatmul.bf16.gmra.mxu0 %v912
      %v933 = vpop.f32.mrf.mxu0
      %v934 = vadd.f32 0.0, %v933
      %v935 = vpop.f32.mrf.mxu0
      %v936 = vadd.f32 0.0, %v935
      %937 = vmatmul.bf16.gmra.mxu0 %v913
      %v938 = vpop.f32.mrf.mxu0
      %v939 = vadd.f32 0.0, %v938
      %v940 = vpop.f32.mrf.mxu0
      %v941 = vadd.f32 0.0, %v940
      %942 = vdwg.mxu0
      %943 = vst.msk [vmem:[%s253 + $0x40] sm:$0xff] %vm901, %v924
      %944 = vst.msk [vmem:[%s253 + $0x48] sm:$0xff] %vm901, %v926
      %945 = vst.msk [vmem:[%s253 + $0x50] sm:$0xff] %vm901, %v929
      %946 = vst.msk [vmem:[%s253 + $0x58] sm:$0xff] %vm901, %v931
      %947 = vst.msk [vmem:[%s253 + $0x60] sm:$0xff] %vm901, %v934
      %948 = vst.msk [vmem:[%s253 + $0x68] sm:$0xff] %vm901, %v936
      %949 = vst.msk [vmem:[%s253 + $0x70] sm:$0xff] %vm901, %v939
      %950 = vst.msk [vmem:[%s253 + $0x78] sm:$0xff] %vm901, %v941
      %s951 = smul.u32 16, %s17
      %p952 = scmp.lt.s32.totalorder %s951, 31
      %s953 = scalar_select %p952, %s951, 31
      %s954 = smul.addr %s953, 8
      %s955 = scalar_lea.vmem %s6, %s954
      // Predicated region
      $region45: #{tpu_custom_call.1} parent=43 // pred_check
        %p956 = pneg %p166
      $region46: #{tpu_custom_call.1} parent=43 // pred_check_branch
        %958 = sbr.rel (%p956) target = $region48
      $region47: #{tpu_custom_call.1} parent=43 // pred_region
        %s959 = smul.u32 16, %s17
      $region48: #{tpu_custom_call.1} parent=43 // pred_fallthru
        _
    $region44: #{tpu_custom_call.1} parent=5 // pred_fallthru
      _
    %p960 = scmp.le.s32.totalorder 2, %s12
    // Predicated region
    $region49: #{tpu_custom_call.1} parent=5 // pred_check
      %p961 = pneg %p960
    $region50: #{tpu_custom_call.1} parent=5 // pred_check_branch
      %963 = sbr.rel (%p961) target = $region52
    $region51: #{tpu_custom_call.1} parent=5 // pred_region
      %s964 = ssub.s32 %s12, 2
      // Predicated region
      $region53: #{tpu_custom_call.1} parent=51 // pred_check
        %p965 = pneg %p172
      $region54: #{tpu_custom_call.1} parent=51 // pred_check_branch
        %967 = sbr.rel (%p965) target = $region56
      $region55: #{tpu_custom_call.1} parent=51 // pred_region
        %s968 = smul.u32 16, %s18
        %p969 = scmp.lt.s32.totalorder %s968, 31
        %s970 = scalar_select %p969, %s968, 31
        %s971 = smul.addr %s970, 8
        %s972 = scalar_lea.vmem %s6, %s971
      $region56: #{tpu_custom_call.1} parent=51 // pred_fallthru
        _
    $region52: #{tpu_custom_call.1} parent=5 // pred_fallthru
      _
  $region6: #{tpu_custom_call.1} parent=0 // loop_footer
    %s16 = sadd.s32 1, %s12
  $region7: #{tpu_custom_call.1} parent=0 // loop_footer_branch
    %11 = sbr.rel target = $region3
  $region8: #{tpu_custom_call.1} parent=0 // loop_exit
    _

</llo_original>
